<compile_context>
chip_gen: v7x
topology: tpu7x:2x2x1
jax: 0.10.0
libtpu: 0.0.40
codegen_flags: <defaults>
</compile_context>

<pallas_src>
import functools

import jax
import jax.numpy as jnp
import numpy as np
from jax import lax
from jax.experimental import pallas as pl
from jax.experimental.pallas import tpu as pltpu


def _lstm_fc_softmax_kernel(max_norm_val, n_hidden,
                            x_ref, wih_ref, whh_ref, b_ref,
                            fcw_ref, fcb_ref, out_ref, xw_sc):
    H = n_hidden
    B = out_ref.shape[0]            # padded batch (multiple of 8)
    T = x_ref.shape[0] // B

    # ---- hoisted input projection (one big MXU matmul, bias folded once) ----
    xw_sc[...] = (jnp.dot(x_ref[...], wih_ref[...],
                          preferred_element_type=jnp.float32)
                  + b_ref[...])                               # (T*B, 4H)

    whh = whh_ref[...]              # hoist weight load out of the serial loop

    # ---- LSTM recurrence (init_hidden -> zeros); h/c carried in vregs -------
    def step(t, carry):
        h, c = carry
        row = pl.multiple_of(t * B, B)
        gates = xw_sc[pl.ds(row, B), :] + jnp.dot(
            h, whh, preferred_element_type=jnp.float32)       # (B, 4H)
        # full-vreg activations first, slice after (2 EUP pushes per step)
        sig = jax.nn.sigmoid(gates)
        th = jnp.tanh(gates)
        i_g = sig[:, 0:H]
        f_g = sig[:, H:2 * H]
        g_g = th[:, 2 * H:3 * H]
        o_g = sig[:, 3 * H:4 * H]
        c_new = f_g * c + i_g * g_g
        h_new = o_g * jnp.tanh(c_new)
        return (h_new, c_new)

    h0 = jnp.zeros((B, H), jnp.float32)
    c0 = jnp.zeros((B, H), jnp.float32)
    h_last, _ = lax.fori_loop(0, T, step, (h0, c0), unroll=True)

    # nn.Dropout in inference mode is identity.
    # TODO(synk): training-mode dropout (drop_prob) not implemented.

    # ---- max_norm constraint on fc.weight ------------------------------------
    # PyTorch fc.weight is (n_classes, H), norm over dim=0; fcw_ref is the
    # transposed weight (H, n_classes) so the reduction is over axis=1.
    wt = fcw_ref[...]
    norm = jnp.sqrt(jnp.sum(wt * wt, axis=1, keepdims=True))
    norm = jnp.maximum(norm, max_norm_val * 0.5)              # clamp(min=max_norm/2)
    desired = jnp.minimum(norm, max_norm_val)                 # clamp(max=max_norm)
    wt = wt * (desired * pl.reciprocal(norm, approx=True))

    # ---- fc on last-step hidden (== fc(all steps)[:, -1, :]) + softmax -------
    logits = jnp.dot(h_last, wt, preferred_element_type=jnp.float32) + fcb_ref[...]
    m = jnp.max(logits, axis=1, keepdims=True)
    e = jnp.exp(logits - m)
    out_ref[...] = e * pl.reciprocal(jnp.sum(e, axis=1, keepdims=True), approx=True)


def model_forward(x_btc, params, max_norm_val):
    B, T, C = x_btc.shape
    H = params["w_hh"].shape[1]
    n_classes = params["fc_w"].shape[0]
    B_pad = int(-(-B // 8) * 8)     # pad batch rows to the sublane tile (8)

    x_tbc = jnp.transpose(x_btc, (1, 0, 2)).astype(jnp.float32)    # (T, B, C)
    if B_pad != B:
        x_tbc = jnp.pad(x_tbc, ((0, 0), (0, B_pad - B), (0, 0)))
    x_2d = x_tbc.reshape(T * B_pad, C)                             # (T*B_pad, C)

    wih_t = params["w_ih"].T.astype(jnp.float32)                   # (C, 4H)
    whh_t = params["w_hh"].T.astype(jnp.float32)                   # (H, 4H)
    bias = (params["b_ih"] + params["b_hh"]).reshape(1, 4 * H).astype(jnp.float32)
    fcw_t = params["fc_w"].T.astype(jnp.float32)                   # (H, n_classes)
    fcb = params["fc_b"].reshape(1, n_classes).astype(jnp.float32)

    kernel = functools.partial(_lstm_fc_softmax_kernel, float(max_norm_val), H)

    out = pl.pallas_call(
        kernel,
        out_shape=jax.ShapeDtypeStruct((B_pad, n_classes), jnp.float32),
        grid=(1,),
        in_specs=[
            pl.BlockSpec((T * B_pad, C), lambda i: (0, 0)),
            pl.BlockSpec((C, 4 * H), lambda i: (0, 0)),
            pl.BlockSpec((H, 4 * H), lambda i: (0, 0)),
            pl.BlockSpec((1, 4 * H), lambda i: (0, 0)),
            pl.BlockSpec((H, n_classes), lambda i: (0, 0)),
            pl.BlockSpec((1, n_classes), lambda i: (0, 0)),
        ],
        out_specs=pl.BlockSpec((B_pad, n_classes), lambda i: (0, 0)),
        scratch_shapes=[
            pltpu.VMEM((T * B_pad, 4 * H), jnp.float32),   # hoisted x-projection
        ],
        compiler_params=pltpu.CompilerParams(
            dimension_semantics=("arbitrary",)),
    )(x_2d, wih_t, whh_t, bias, fcw_t, fcb)
    return out[:B]


def _reference_forward(x_btc, params, max_norm_val):
    """Pure-JAX reference matching PyTorch semantics (for validation)."""
    B, T, C = x_btc.shape
    H = params["w_hh"].shape[1]
    h = jnp.zeros((B, H), jnp.float32)
    c = jnp.zeros((B, H), jnp.float32)
    for t in range(T):
        gates = (x_btc[:, t, :] @ params["w_ih"].T + h @ params["w_hh"].T
                 + params["b_ih"] + params["b_hh"])
        i_g = jax.nn.sigmoid(gates[:, 0:H])
        f_g = jax.nn.sigmoid(gates[:, H:2 * H])
        g_g = jnp.tanh(gates[:, 2 * H:3 * H])
        o_g = jax.nn.sigmoid(gates[:, 3 * H:4 * H])
        c = f_g * c + i_g * g_g
        h = o_g * jnp.tanh(c)
    w = params["fc_w"]                                   # (n_classes, H)
    norm = jnp.sqrt(jnp.sum(w * w, axis=0, keepdims=True))
    norm = jnp.maximum(norm, max_norm_val / 2.0)
    desired = jnp.minimum(norm, max_norm_val)
    w = w * (desired / norm)
    logits = h @ w.T + params["fc_b"]
    return jax.nn.softmax(logits, axis=1)


if __name__ == "__main__":
    # network_config_params (num_layers=1 branch; SineActivation l1 unused in forward)
    B, T = 4, 10
    n_channels = 8      # LSTM input size
    n_hidden = 32
    n_classes = 8
    max_norm = 2.0

    key = jax.random.PRNGKey(0)
    ks = jax.random.split(key, 8)
    k_lstm = 1.0 / np.sqrt(n_hidden)
    k_fc = 1.0 / np.sqrt(n_hidden)

    params = {
        "w_ih": jax.random.uniform(ks[0], (4 * n_hidden, n_channels),
                                   jnp.float32, -k_lstm, k_lstm),
        "w_hh": jax.random.uniform(ks[1], (4 * n_hidden, n_hidden),
                                   jnp.float32, -k_lstm, k_lstm),
        "b_ih": jax.random.uniform(ks[2], (4 * n_hidden,),
                                   jnp.float32, -k_lstm, k_lstm),
        "b_hh": jax.random.uniform(ks[3], (4 * n_hidden,),
                                   jnp.float32, -k_lstm, k_lstm),
        "fc_w": jax.random.uniform(ks[4], (n_classes, n_hidden),
                                   jnp.float32, -k_fc, k_fc),
        "fc_b": jax.random.uniform(ks[5], (n_classes,),
                                   jnp.float32, -k_fc, k_fc),
    }

    x = jax.random.normal(ks[6], (B, T, n_channels), jnp.float32)  # (B, T, C) batch-first

    out = model_forward(x, params, max_norm)
    out = jax.block_until_ready(out)

    ref = _reference_forward(x, params, max_norm)
    # Tolerance relaxed vs exact-divide version because the kernel uses the
    # EUP approximate reciprocal (pl.reciprocal(approx=True)) in the epilogue.
    np.testing.assert_allclose(np.asarray(out), np.asarray(ref), rtol=5e-3, atol=5e-3)
    assert out.shape == (B, n_classes)
    np.testing.assert_allclose(np.asarray(out).sum(axis=1), np.ones(B),
                               rtol=5e-3, atol=5e-3)

    print("KERNEL_OK")
</pallas_src>

<mosaic_0001>
module attributes {stable_mosaic.version = 11 : i64} {
  func.func @_lstm_fc_softmax_kernel(%arg0: i32, %arg1: memref<80x8xf32, #tpu.memory_space<vmem>>, %arg2: memref<8x128xf32, #tpu.memory_space<vmem>>, %arg3: memref<32x128xf32, #tpu.memory_space<vmem>>, %arg4: memref<1x128xf32, #tpu.memory_space<vmem>>, %arg5: memref<32x8xf32, #tpu.memory_space<vmem>>, %arg6: memref<1x8xf32, #tpu.memory_space<vmem>>, %arg7: memref<8x8xf32, #tpu.memory_space<vmem>>, %arg8: memref<80x128xf32, #tpu.memory_space<vmem>>) attributes {dimension_semantics = [#tpu.dimension_semantics<arbitrary>], iteration_bounds = array<i64: 1>, scalar_prefetch = 0 : i64, scratch_operands = 1 : i64, tpu.core_type = #tpu.core_type<tc>, window_params = [{pipeline_mode = #tpu.pipeline_mode<synchronous>, transform_indices = @transform_0, window_bounds = array<i64: 80, 8>}, {pipeline_mode = #tpu.pipeline_mode<synchronous>, transform_indices = @transform_1, window_bounds = array<i64: 8, 128>}, {pipeline_mode = #tpu.pipeline_mode<synchronous>, transform_indices = @transform_2, window_bounds = array<i64: 32, 128>}, {pipeline_mode = #tpu.pipeline_mode<synchronous>, transform_indices = @transform_3, window_bounds = array<i64: 1, 128>}, {pipeline_mode = #tpu.pipeline_mode<synchronous>, transform_indices = @transform_4, window_bounds = array<i64: 32, 8>}, {pipeline_mode = #tpu.pipeline_mode<synchronous>, transform_indices = @transform_5, window_bounds = array<i64: 1, 8>}, {pipeline_mode = #tpu.pipeline_mode<synchronous>, transform_indices = @transform_6, window_bounds = array<i64: 8, 8>}]} {
    %c0 = arith.constant 0 : index
    %c0_0 = arith.constant 0 : index
    %0 = vector.load %arg1[%c0, %c0_0] : memref<80x8xf32, #tpu.memory_space<vmem>>, vector<80x8xf32>
    %c0_1 = arith.constant 0 : index
    %c0_2 = arith.constant 0 : index
    %1 = vector.load %arg2[%c0_1, %c0_2] : memref<8x128xf32, #tpu.memory_space<vmem>>, vector<8x128xf32>
    %cst = arith.constant dense<0.000000e+00> : vector<80x128xf32>
    %2 = tpu.matmul %0, %1, %cst {dimension_numbers = #tpu.dot_dimension_numbers<[1], [0], [0], [1], [0, 0, 1, 1], [], []>} : vector<80x8xf32>, vector<8x128xf32>, vector<80x128xf32> -> vector<80x128xf32>
    %c0_3 = arith.constant 0 : index
    %c0_4 = arith.constant 0 : index
    %3 = vector.load %arg4[%c0_3, %c0_4] : memref<1x128xf32, #tpu.memory_space<vmem>>, vector<1x128xf32>
    %4 = vector.broadcast %3 : vector<1x128xf32> to vector<80x128xf32>
    %5 = arith.addf %2, %4 : vector<80x128xf32>
    %c0_5 = arith.constant 0 : index
    %c0_6 = arith.constant 0 : index
    %6 = vector.load %arg8[%c0_5, %c0_6] : memref<80x128xf32, #tpu.memory_space<vmem>>, vector<80x128xf32>
    tpu.vector_store %arg8[%c0_5, %c0_6], %5 {strides = array<i32>} : memref<80x128xf32, #tpu.memory_space<vmem>>, vector<80x128xf32>,
    %c0_7 = arith.constant 0 : index
    %c0_8 = arith.constant 0 : index
    %7 = vector.load %arg3[%c0_7, %c0_8] : memref<32x128xf32, #tpu.memory_space<vmem>>, vector<32x128xf32>
    %cst_9 = arith.constant 0.000000e+00 : f32
    %8 = vector.broadcast %cst_9 : f32 to vector<8x32xf32>
    %cst_10 = arith.constant 0.000000e+00 : f32
    %9 = vector.broadcast %cst_10 : f32 to vector<8x32xf32>
    %c0_i32 = arith.constant 0 : i32
    %c8_i32 = arith.constant 8 : i32
    %10 = arith.muli %c0_i32, %c8_i32 : i32
    %11 = tpu.assume_multiple %10, 8 : i32
    %12 = arith.index_cast %11 : i32 to index
    %c0_11 = arith.constant 0 : index
    %13 = vector.load %arg8[%12, %c0_11] : memref<80x128xf32, #tpu.memory_space<vmem>>, vector<8x128xf32>
    %cst_12 = arith.constant dense<0.000000e+00> : vector<8x128xf32>
    %14 = tpu.matmul %8, %7, %cst_12 {dimension_numbers = #tpu.dot_dimension_numbers<[1], [0], [0], [1], [0, 0, 1, 1], [], []>} : vector<8x32xf32>, vector<32x128xf32>, vector<8x128xf32> -> vector<8x128xf32>
    %15 = arith.addf %13, %14 : vector<8x128xf32>
    %16 = arith.negf %15 : vector<8x128xf32>
    %17 = math.exp %16 : vector<8x128xf32>
    %cst_13 = arith.constant 1.000000e+00 : f32
    %18 = vector.broadcast %cst_13 : f32 to vector<8x128xf32>
    %19 = arith.addf %18, %17 : vector<8x128xf32>
    %20 = arith.divf %18, %19 : vector<8x128xf32>
    %21 = math.tanh %15 : vector<8x128xf32>
    %22 = vector.extract_strided_slice %20 {offsets = [0, 0], sizes = [8, 32], strides = [1, 1]} : vector<8x128xf32> to vector<8x32xf32>
    %23 = vector.extract_strided_slice %20 {offsets = [0, 32], sizes = [8, 32], strides = [1, 1]} : vector<8x128xf32> to vector<8x32xf32>
    %24 = vector.extract_strided_slice %21 {offsets = [0, 64], sizes = [8, 32], strides = [1, 1]} : vector<8x128xf32> to vector<8x32xf32>
    %25 = vector.extract_strided_slice %20 {offsets = [0, 96], sizes = [8, 32], strides = [1, 1]} : vector<8x128xf32> to vector<8x32xf32>
    %26 = arith.mulf %23, %9 : vector<8x32xf32>
    %27 = arith.mulf %22, %24 : vector<8x32xf32>
    %28 = arith.addf %26, %27 : vector<8x32xf32>
    %29 = math.tanh %28 : vector<8x32xf32>
    %30 = arith.mulf %25, %29 : vector<8x32xf32>
    %c1_i32 = arith.constant 1 : i32
    %c8_i32_14 = arith.constant 8 : i32
    %31 = arith.muli %c1_i32, %c8_i32_14 : i32
    %32 = tpu.assume_multiple %31, 8 : i32
    %33 = arith.index_cast %32 : i32 to index
    %c0_15 = arith.constant 0 : index
    %34 = vector.load %arg8[%33, %c0_15] : memref<80x128xf32, #tpu.memory_space<vmem>>, vector<8x128xf32>
    %cst_16 = arith.constant dense<0.000000e+00> : vector<8x128xf32>
    %35 = tpu.matmul %30, %7, %cst_16 {dimension_numbers = #tpu.dot_dimension_numbers<[1], [0], [0], [1], [0, 0, 1, 1], [], []>} : vector<8x32xf32>, vector<32x128xf32>, vector<8x128xf32> -> vector<8x128xf32>
    %36 = arith.addf %34, %35 : vector<8x128xf32>
    %37 = arith.negf %36 : vector<8x128xf32>
    %38 = math.exp %37 : vector<8x128xf32>
    %cst_17 = arith.constant 1.000000e+00 : f32
    %39 = vector.broadcast %cst_17 : f32 to vector<8x128xf32>
    %40 = arith.addf %39, %38 : vector<8x128xf32>
    %41 = arith.divf %39, %40 : vector<8x128xf32>
    %42 = math.tanh %36 : vector<8x128xf32>
    %43 = vector.extract_strided_slice %41 {offsets = [0, 0], sizes = [8, 32], strides = [1, 1]} : vector<8x128xf32> to vector<8x32xf32>
    %44 = vector.extract_strided_slice %41 {offsets = [0, 32], sizes = [8, 32], strides = [1, 1]} : vector<8x128xf32> to vector<8x32xf32>
    %45 = vector.extract_strided_slice %42 {offsets = [0, 64], sizes = [8, 32], strides = [1, 1]} : vector<8x128xf32> to vector<8x32xf32>
    %46 = vector.extract_strided_slice %41 {offsets = [0, 96], sizes = [8, 32], strides = [1, 1]} : vector<8x128xf32> to vector<8x32xf32>
    %47 = arith.mulf %44, %28 : vector<8x32xf32>
    %48 = arith.mulf %43, %45 : vector<8x32xf32>
    %49 = arith.addf %47, %48 : vector<8x32xf32>
    %50 = math.tanh %49 : vector<8x32xf32>
    %51 = arith.mulf %46, %50 : vector<8x32xf32>
    %c2_i32 = arith.constant 2 : i32
    %c8_i32_18 = arith.constant 8 : i32
    %52 = arith.muli %c2_i32, %c8_i32_18 : i32
    %53 = tpu.assume_multiple %52, 8 : i32
    %54 = arith.index_cast %53 : i32 to index
    %c0_19 = arith.constant 0 : index
    %55 = vector.load %arg8[%54, %c0_19] : memref<80x128xf32, #tpu.memory_space<vmem>>, vector<8x128xf32>
    %cst_20 = arith.constant dense<0.000000e+00> : vector<8x128xf32>
    %56 = tpu.matmul %51, %7, %cst_20 {dimension_numbers = #tpu.dot_dimension_numbers<[1], [0], [0], [1], [0, 0, 1, 1], [], []>} : vector<8x32xf32>, vector<32x128xf32>, vector<8x128xf32> -> vector<8x128xf32>
    %57 = arith.addf %55, %56 : vector<8x128xf32>
    %58 = arith.negf %57 : vector<8x128xf32>
    %59 = math.exp %58 : vector<8x128xf32>
    %cst_21 = arith.constant 1.000000e+00 : f32
    %60 = vector.broadcast %cst_21 : f32 to vector<8x128xf32>
    %61 = arith.addf %60, %59 : vector<8x128xf32>
    %62 = arith.divf %60, %61 : vector<8x128xf32>
    %63 = math.tanh %57 : vector<8x128xf32>
    %64 = vector.extract_strided_slice %62 {offsets = [0, 0], sizes = [8, 32], strides = [1, 1]} : vector<8x128xf32> to vector<8x32xf32>
    %65 = vector.extract_strided_slice %62 {offsets = [0, 32], sizes = [8, 32], strides = [1, 1]} : vector<8x128xf32> to vector<8x32xf32>
    %66 = vector.extract_strided_slice %63 {offsets = [0, 64], sizes = [8, 32], strides = [1, 1]} : vector<8x128xf32> to vector<8x32xf32>
    %67 = vector.extract_strided_slice %62 {offsets = [0, 96], sizes = [8, 32], strides = [1, 1]} : vector<8x128xf32> to vector<8x32xf32>
    %68 = arith.mulf %65, %49 : vector<8x32xf32>
    %69 = arith.mulf %64, %66 : vector<8x32xf32>
    %70 = arith.addf %68, %69 : vector<8x32xf32>
    %71 = math.tanh %70 : vector<8x32xf32>
    %72 = arith.mulf %67, %71 : vector<8x32xf32>
    %c3_i32 = arith.constant 3 : i32
    %c8_i32_22 = arith.constant 8 : i32
    %73 = arith.muli %c3_i32, %c8_i32_22 : i32
    %74 = tpu.assume_multiple %73, 8 : i32
    %75 = arith.index_cast %74 : i32 to index
    %c0_23 = arith.constant 0 : index
    %76 = vector.load %arg8[%75, %c0_23] : memref<80x128xf32, #tpu.memory_space<vmem>>, vector<8x128xf32>
    %cst_24 = arith.constant dense<0.000000e+00> : vector<8x128xf32>
    %77 = tpu.matmul %72, %7, %cst_24 {dimension_numbers = #tpu.dot_dimension_numbers<[1], [0], [0], [1], [0, 0, 1, 1], [], []>} : vector<8x32xf32>, vector<32x128xf32>, vector<8x128xf32> -> vector<8x128xf32>
    %78 = arith.addf %76, %77 : vector<8x128xf32>
    %79 = arith.negf %78 : vector<8x128xf32>
    %80 = math.exp %79 : vector<8x128xf32>
    %cst_25 = arith.constant 1.000000e+00 : f32
    %81 = vector.broadcast %cst_25 : f32 to vector<8x128xf32>
    %82 = arith.addf %81, %80 : vector<8x128xf32>
    %83 = arith.divf %81, %82 : vector<8x128xf32>
    %84 = math.tanh %78 : vector<8x128xf32>
    %85 = vector.extract_strided_slice %83 {offsets = [0, 0], sizes = [8, 32], strides = [1, 1]} : vector<8x128xf32> to vector<8x32xf32>
    %86 = vector.extract_strided_slice %83 {offsets = [0, 32], sizes = [8, 32], strides = [1, 1]} : vector<8x128xf32> to vector<8x32xf32>
    %87 = vector.extract_strided_slice %84 {offsets = [0, 64], sizes = [8, 32], strides = [1, 1]} : vector<8x128xf32> to vector<8x32xf32>
    %88 = vector.extract_strided_slice %83 {offsets = [0, 96], sizes = [8, 32], strides = [1, 1]} : vector<8x128xf32> to vector<8x32xf32>
    %89 = arith.mulf %86, %70 : vector<8x32xf32>
    %90 = arith.mulf %85, %87 : vector<8x32xf32>
    %91 = arith.addf %89, %90 : vector<8x32xf32>
    %92 = math.tanh %91 : vector<8x32xf32>
    %93 = arith.mulf %88, %92 : vector<8x32xf32>
    %c4_i32 = arith.constant 4 : i32
    %c8_i32_26 = arith.constant 8 : i32
    %94 = arith.muli %c4_i32, %c8_i32_26 : i32
    %95 = tpu.assume_multiple %94, 8 : i32
    %96 = arith.index_cast %95 : i32 to index
    %c0_27 = arith.constant 0 : index
    %97 = vector.load %arg8[%96, %c0_27] : memref<80x128xf32, #tpu.memory_space<vmem>>, vector<8x128xf32>
    %cst_28 = arith.constant dense<0.000000e+00> : vector<8x128xf32>
    %98 = tpu.matmul %93, %7, %cst_28 {dimension_numbers = #tpu.dot_dimension_numbers<[1], [0], [0], [1], [0, 0, 1, 1], [], []>} : vector<8x32xf32>, vector<32x128xf32>, vector<8x128xf32> -> vector<8x128xf32>
    %99 = arith.addf %97, %98 : vector<8x128xf32>
    %100 = arith.negf %99 : vector<8x128xf32>
    %101 = math.exp %100 : vector<8x128xf32>
    %cst_29 = arith.constant 1.000000e+00 : f32
    %102 = vector.broadcast %cst_29 : f32 to vector<8x128xf32>
    %103 = arith.addf %102, %101 : vector<8x128xf32>
    %104 = arith.divf %102, %103 : vector<8x128xf32>
    %105 = math.tanh %99 : vector<8x128xf32>
    %106 = vector.extract_strided_slice %104 {offsets = [0, 0], sizes = [8, 32], strides = [1, 1]} : vector<8x128xf32> to vector<8x32xf32>
    %107 = vector.extract_strided_slice %104 {offsets = [0, 32], sizes = [8, 32], strides = [1, 1]} : vector<8x128xf32> to vector<8x32xf32>
    %108 = vector.extract_strided_slice %105 {offsets = [0, 64], sizes = [8, 32], strides = [1, 1]} : vector<8x128xf32> to vector<8x32xf32>
    %109 = vector.extract_strided_slice %104 {offsets = [0, 96], sizes = [8, 32], strides = [1, 1]} : vector<8x128xf32> to vector<8x32xf32>
    %110 = arith.mulf %107, %91 : vector<8x32xf32>
    %111 = arith.mulf %106, %108 : vector<8x32xf32>
    %112 = arith.addf %110, %111 : vector<8x32xf32>
    %113 = math.tanh %112 : vector<8x32xf32>
    %114 = arith.mulf %109, %113 : vector<8x32xf32>
    %c5_i32 = arith.constant 5 : i32
    %c8_i32_30 = arith.constant 8 : i32
    %115 = arith.muli %c5_i32, %c8_i32_30 : i32
    %116 = tpu.assume_multiple %115, 8 : i32
    %117 = arith.index_cast %116 : i32 to index
    %c0_31 = arith.constant 0 : index
    %118 = vector.load %arg8[%117, %c0_31] : memref<80x128xf32, #tpu.memory_space<vmem>>, vector<8x128xf32>
    %cst_32 = arith.constant dense<0.000000e+00> : vector<8x128xf32>
    %119 = tpu.matmul %114, %7, %cst_32 {dimension_numbers = #tpu.dot_dimension_numbers<[1], [0], [0], [1], [0, 0, 1, 1], [], []>} : vector<8x32xf32>, vector<32x128xf32>, vector<8x128xf32> -> vector<8x128xf32>
    %120 = arith.addf %118, %119 : vector<8x128xf32>
    %121 = arith.negf %120 : vector<8x128xf32>
    %122 = math.exp %121 : vector<8x128xf32>
    %cst_33 = arith.constant 1.000000e+00 : f32
    %123 = vector.broadcast %cst_33 : f32 to vector<8x128xf32>
    %124 = arith.addf %123, %122 : vector<8x128xf32>
    %125 = arith.divf %123, %124 : vector<8x128xf32>
    %126 = math.tanh %120 : vector<8x128xf32>
    %127 = vector.extract_strided_slice %125 {offsets = [0, 0], sizes = [8, 32], strides = [1, 1]} : vector<8x128xf32> to vector<8x32xf32>
    %128 = vector.extract_strided_slice %125 {offsets = [0, 32], sizes = [8, 32], strides = [1, 1]} : vector<8x128xf32> to vector<8x32xf32>
    %129 = vector.extract_strided_slice %126 {offsets = [0, 64], sizes = [8, 32], strides = [1, 1]} : vector<8x128xf32> to vector<8x32xf32>
    %130 = vector.extract_strided_slice %125 {offsets = [0, 96], sizes = [8, 32], strides = [1, 1]} : vector<8x128xf32> to vector<8x32xf32>
    %131 = arith.mulf %128, %112 : vector<8x32xf32>
    %132 = arith.mulf %127, %129 : vector<8x32xf32>
    %133 = arith.addf %131, %132 : vector<8x32xf32>
    %134 = math.tanh %133 : vector<8x32xf32>
    %135 = arith.mulf %130, %134 : vector<8x32xf32>
    %c6_i32 = arith.constant 6 : i32
    %c8_i32_34 = arith.constant 8 : i32
    %136 = arith.muli %c6_i32, %c8_i32_34 : i32
    %137 = tpu.assume_multiple %136, 8 : i32
    %138 = arith.index_cast %137 : i32 to index
    %c0_35 = arith.constant 0 : index
    %139 = vector.load %arg8[%138, %c0_35] : memref<80x128xf32, #tpu.memory_space<vmem>>, vector<8x128xf32>
    %cst_36 = arith.constant dense<0.000000e+00> : vector<8x128xf32>
    %140 = tpu.matmul %135, %7, %cst_36 {dimension_numbers = #tpu.dot_dimension_numbers<[1], [0], [0], [1], [0, 0, 1, 1], [], []>} : vector<8x32xf32>, vector<32x128xf32>, vector<8x128xf32> -> vector<8x128xf32>
    %141 = arith.addf %139, %140 : vector<8x128xf32>
    %142 = arith.negf %141 : vector<8x128xf32>
    %143 = math.exp %142 : vector<8x128xf32>
    %cst_37 = arith.constant 1.000000e+00 : f32
    %144 = vector.broadcast %cst_37 : f32 to vector<8x128xf32>
    %145 = arith.addf %144, %143 : vector<8x128xf32>
    %146 = arith.divf %144, %145 : vector<8x128xf32>
    %147 = math.tanh %141 : vector<8x128xf32>
    %148 = vector.extract_strided_slice %146 {offsets = [0, 0], sizes = [8, 32], strides = [1, 1]} : vector<8x128xf32> to vector<8x32xf32>
    %149 = vector.extract_strided_slice %146 {offsets = [0, 32], sizes = [8, 32], strides = [1, 1]} : vector<8x128xf32> to vector<8x32xf32>
    %150 = vector.extract_strided_slice %147 {offsets = [0, 64], sizes = [8, 32], strides = [1, 1]} : vector<8x128xf32> to vector<8x32xf32>
    %151 = vector.extract_strided_slice %146 {offsets = [0, 96], sizes = [8, 32], strides = [1, 1]} : vector<8x128xf32> to vector<8x32xf32>
    %152 = arith.mulf %149, %133 : vector<8x32xf32>
    %153 = arith.mulf %148, %150 : vector<8x32xf32>
    %154 = arith.addf %152, %153 : vector<8x32xf32>
    %155 = math.tanh %154 : vector<8x32xf32>
    %156 = arith.mulf %151, %155 : vector<8x32xf32>
    %c7_i32 = arith.constant 7 : i32
    %c8_i32_38 = arith.constant 8 : i32
    %157 = arith.muli %c7_i32, %c8_i32_38 : i32
    %158 = tpu.assume_multiple %157, 8 : i32
    %159 = arith.index_cast %158 : i32 to index
    %c0_39 = arith.constant 0 : index
    %160 = vector.load %arg8[%159, %c0_39] : memref<80x128xf32, #tpu.memory_space<vmem>>, vector<8x128xf32>
    %cst_40 = arith.constant dense<0.000000e+00> : vector<8x128xf32>
    %161 = tpu.matmul %156, %7, %cst_40 {dimension_numbers = #tpu.dot_dimension_numbers<[1], [0], [0], [1], [0, 0, 1, 1], [], []>} : vector<8x32xf32>, vector<32x128xf32>, vector<8x128xf32> -> vector<8x128xf32>
    %162 = arith.addf %160, %161 : vector<8x128xf32>
    %163 = arith.negf %162 : vector<8x128xf32>
    %164 = math.exp %163 : vector<8x128xf32>
    %cst_41 = arith.constant 1.000000e+00 : f32
    %165 = vector.broadcast %cst_41 : f32 to vector<8x128xf32>
    %166 = arith.addf %165, %164 : vector<8x128xf32>
    %167 = arith.divf %165, %166 : vector<8x128xf32>
    %168 = math.tanh %162 : vector<8x128xf32>
    %169 = vector.extract_strided_slice %167 {offsets = [0, 0], sizes = [8, 32], strides = [1, 1]} : vector<8x128xf32> to vector<8x32xf32>
    %170 = vector.extract_strided_slice %167 {offsets = [0, 32], sizes = [8, 32], strides = [1, 1]} : vector<8x128xf32> to vector<8x32xf32>
    %171 = vector.extract_strided_slice %168 {offsets = [0, 64], sizes = [8, 32], strides = [1, 1]} : vector<8x128xf32> to vector<8x32xf32>
    %172 = vector.extract_strided_slice %167 {offsets = [0, 96], sizes = [8, 32], strides = [1, 1]} : vector<8x128xf32> to vector<8x32xf32>
    %173 = arith.mulf %170, %154 : vector<8x32xf32>
    %174 = arith.mulf %169, %171 : vector<8x32xf32>
    %175 = arith.addf %173, %174 : vector<8x32xf32>
    %176 = math.tanh %175 : vector<8x32xf32>
    %177 = arith.mulf %172, %176 : vector<8x32xf32>
    %c8_i32_42 = arith.constant 8 : i32
    %c8_i32_43 = arith.constant 8 : i32
    %178 = arith.muli %c8_i32_42, %c8_i32_43 : i32
    %179 = tpu.assume_multiple %178, 8 : i32
    %180 = arith.index_cast %179 : i32 to index
    %c0_44 = arith.constant 0 : index
    %181 = vector.load %arg8[%180, %c0_44] : memref<80x128xf32, #tpu.memory_space<vmem>>, vector<8x128xf32>
    %cst_45 = arith.constant dense<0.000000e+00> : vector<8x128xf32>
    %182 = tpu.matmul %177, %7, %cst_45 {dimension_numbers = #tpu.dot_dimension_numbers<[1], [0], [0], [1], [0, 0, 1, 1], [], []>} : vector<8x32xf32>, vector<32x128xf32>, vector<8x128xf32> -> vector<8x128xf32>
    %183 = arith.addf %181, %182 : vector<8x128xf32>
    %184 = arith.negf %183 : vector<8x128xf32>
    %185 = math.exp %184 : vector<8x128xf32>
    %cst_46 = arith.constant 1.000000e+00 : f32
    %186 = vector.broadcast %cst_46 : f32 to vector<8x128xf32>
    %187 = arith.addf %186, %185 : vector<8x128xf32>
    %188 = arith.divf %186, %187 : vector<8x128xf32>
    %189 = math.tanh %183 : vector<8x128xf32>
    %190 = vector.extract_strided_slice %188 {offsets = [0, 0], sizes = [8, 32], strides = [1, 1]} : vector<8x128xf32> to vector<8x32xf32>
    %191 = vector.extract_strided_slice %188 {offsets = [0, 32], sizes = [8, 32], strides = [1, 1]} : vector<8x128xf32> to vector<8x32xf32>
    %192 = vector.extract_strided_slice %189 {offsets = [0, 64], sizes = [8, 32], strides = [1, 1]} : vector<8x128xf32> to vector<8x32xf32>
    %193 = vector.extract_strided_slice %188 {offsets = [0, 96], sizes = [8, 32], strides = [1, 1]} : vector<8x128xf32> to vector<8x32xf32>
    %194 = arith.mulf %191, %175 : vector<8x32xf32>
    %195 = arith.mulf %190, %192 : vector<8x32xf32>
    %196 = arith.addf %194, %195 : vector<8x32xf32>
    %197 = math.tanh %196 : vector<8x32xf32>
    %198 = arith.mulf %193, %197 : vector<8x32xf32>
    %c9_i32 = arith.constant 9 : i32
    %c8_i32_47 = arith.constant 8 : i32
    %199 = arith.muli %c9_i32, %c8_i32_47 : i32
    %200 = tpu.assume_multiple %199, 8 : i32
    %201 = arith.index_cast %200 : i32 to index
    %c0_48 = arith.constant 0 : index
    %202 = vector.load %arg8[%201, %c0_48] : memref<80x128xf32, #tpu.memory_space<vmem>>, vector<8x128xf32>
    %cst_49 = arith.constant dense<0.000000e+00> : vector<8x128xf32>
    %203 = tpu.matmul %198, %7, %cst_49 {dimension_numbers = #tpu.dot_dimension_numbers<[1], [0], [0], [1], [0, 0, 1, 1], [], []>} : vector<8x32xf32>, vector<32x128xf32>, vector<8x128xf32> -> vector<8x128xf32>
    %204 = arith.addf %202, %203 : vector<8x128xf32>
    %205 = arith.negf %204 : vector<8x128xf32>
    %206 = math.exp %205 : vector<8x128xf32>
    %cst_50 = arith.constant 1.000000e+00 : f32
    %207 = vector.broadcast %cst_50 : f32 to vector<8x128xf32>
    %208 = arith.addf %207, %206 : vector<8x128xf32>
    %209 = arith.divf %207, %208 : vector<8x128xf32>
    %210 = math.tanh %204 : vector<8x128xf32>
    %211 = vector.extract_strided_slice %209 {offsets = [0, 0], sizes = [8, 32], strides = [1, 1]} : vector<8x128xf32> to vector<8x32xf32>
    %212 = vector.extract_strided_slice %209 {offsets = [0, 32], sizes = [8, 32], strides = [1, 1]} : vector<8x128xf32> to vector<8x32xf32>
    %213 = vector.extract_strided_slice %210 {offsets = [0, 64], sizes = [8, 32], strides = [1, 1]} : vector<8x128xf32> to vector<8x32xf32>
    %214 = vector.extract_strided_slice %209 {offsets = [0, 96], sizes = [8, 32], strides = [1, 1]} : vector<8x128xf32> to vector<8x32xf32>
    %215 = arith.mulf %212, %196 : vector<8x32xf32>
    %216 = arith.mulf %211, %213 : vector<8x32xf32>
    %217 = arith.addf %215, %216 : vector<8x32xf32>
    %218 = math.tanh %217 : vector<8x32xf32>
    %219 = arith.mulf %214, %218 : vector<8x32xf32>
    %c10_i32 = arith.constant 10 : i32
    %c0_51 = arith.constant 0 : index
    %c0_52 = arith.constant 0 : index
    %220 = vector.load %arg5[%c0_51, %c0_52] : memref<32x8xf32, #tpu.memory_space<vmem>>, vector<32x8xf32>
    %221 = arith.mulf %220, %220 : vector<32x8xf32>
    %cst_53 = arith.constant dense<0.000000e+00> : vector<32xf32>
    %222 = vector.multi_reduction <add>, %221, %cst_53 [1] : vector<32x8xf32> to vector<32xf32>
    %223 = vector.shape_cast %222 : vector<32xf32> to vector<32x1xf32>
    %224 = math.sqrt %223 : vector<32x1xf32>
    %cst_54 = arith.constant 1.000000e+00 : f32
    %225 = vector.broadcast %cst_54 : f32 to vector<32x1xf32>
    %226 = arith.maximumf %224, %225 : vector<32x1xf32>
    %cst_55 = arith.constant 2.000000e+00 : f32
    %227 = vector.broadcast %cst_55 : f32 to vector<32x1xf32>
    %228 = arith.minimumf %226, %227 : vector<32x1xf32>
    %229 = tpu.reciprocal %226 {approx = true} : vector<32x1xf32> -> vector<32x1xf32>
    %230 = arith.mulf %228, %229 : vector<32x1xf32>
    %231 = vector.broadcast %230 : vector<32x1xf32> to vector<32x8xf32>
    %232 = arith.mulf %220, %231 : vector<32x8xf32>
    %cst_56 = arith.constant dense<0.000000e+00> : vector<8x8xf32>
    %233 = tpu.matmul %219, %232, %cst_56 {dimension_numbers = #tpu.dot_dimension_numbers<[1], [0], [0], [1], [0, 0, 1, 1], [], []>} : vector<8x32xf32>, vector<32x8xf32>, vector<8x8xf32> -> vector<8x8xf32>
    %c0_57 = arith.constant 0 : index
    %c0_58 = arith.constant 0 : index
    %234 = vector.load %arg6[%c0_57, %c0_58] : memref<1x8xf32, #tpu.memory_space<vmem>>, vector<1x8xf32>
    %235 = vector.broadcast %234 : vector<1x8xf32> to vector<8x8xf32>
    %236 = arith.addf %233, %235 : vector<8x8xf32>
    %cst_59 = arith.constant dense<0xFF800000> : vector<8xf32>
    %237 = vector.multi_reduction <maximumf>, %236, %cst_59 [1] : vector<8x8xf32> to vector<8xf32>
    %238 = vector.shape_cast %237 : vector<8xf32> to vector<8x1xf32>
    %239 = vector.broadcast %238 : vector<8x1xf32> to vector<8x8xf32>
    %240 = arith.subf %236, %239 : vector<8x8xf32>
    %241 = math.exp %240 : vector<8x8xf32>
    %cst_60 = arith.constant dense<0.000000e+00> : vector<8xf32>
    %242 = vector.multi_reduction <add>, %241, %cst_60 [1] : vector<8x8xf32> to vector<8xf32>
    %243 = vector.shape_cast %242 : vector<8xf32> to vector<8x1xf32>
    %244 = tpu.reciprocal %243 {approx = true} : vector<8x1xf32> -> vector<8x1xf32>
    %245 = vector.broadcast %244 : vector<8x1xf32> to vector<8x8xf32>
    %246 = arith.mulf %241, %245 : vector<8x8xf32>
    %c0_61 = arith.constant 0 : index
    %c0_62 = arith.constant 0 : index
    %247 = vector.load %arg7[%c0_61, %c0_62] : memref<8x8xf32, #tpu.memory_space<vmem>>, vector<8x8xf32>
    tpu.vector_store %arg7[%c0_61, %c0_62], %246 {strides = array<i32>} : memref<8x8xf32, #tpu.memory_space<vmem>>, vector<8x8xf32>,
    return
  }
  func.func @transform_0(%arg0: i32) -> (i32, i32) {
    %c0_i32 = arith.constant 0 : i32
    %c0_i32_0 = arith.constant 0 : i32
    %c0_i32_1 = arith.constant 0 : i32
    return %c0_i32, %c0_i32_0 : i32, i32
  }
  func.func @transform_1(%arg0: i32) -> (i32, i32) {
    %c0_i32 = arith.constant 0 : i32
    %c0_i32_0 = arith.constant 0 : i32
    %c0_i32_1 = arith.constant 0 : i32
    return %c0_i32, %c0_i32_0 : i32, i32
  }
  func.func @transform_2(%arg0: i32) -> (i32, i32) {
    %c0_i32 = arith.constant 0 : i32
    %c0_i32_0 = arith.constant 0 : i32
    %c0_i32_1 = arith.constant 0 : i32
    return %c0_i32, %c0_i32_0 : i32, i32
  }
  func.func @transform_3(%arg0: i32) -> (i32, i32) {
    %c0_i32 = arith.constant 0 : i32
    %c0_i32_0 = arith.constant 0 : i32
    %c0_i32_1 = arith.constant 0 : i32
    return %c0_i32, %c0_i32_0 : i32, i32
  }
  func.func @transform_4(%arg0: i32) -> (i32, i32) {
    %c0_i32 = arith.constant 0 : i32
    %c0_i32_0 = arith.constant 0 : i32
    %c0_i32_1 = arith.constant 0 : i32
    return %c0_i32, %c0_i32_0 : i32, i32
  }
  func.func @transform_5(%arg0: i32) -> (i32, i32) {
    %c0_i32 = arith.constant 0 : i32
    %c0_i32_0 = arith.constant 0 : i32
    %c0_i32_1 = arith.constant 0 : i32
    return %c0_i32, %c0_i32_0 : i32, i32
  }
  func.func @transform_6(%arg0: i32) -> (i32, i32) {
    %c0_i32 = arith.constant 0 : i32
    %c0_i32_0 = arith.constant 0 : i32
    %c0_i32_1 = arith.constant 0 : i32
    return %c0_i32, %c0_i32_0 : i32, i32
  }
}

</mosaic_0001>

<llo_original>
// kernel: tpu_custom_call.1
$region0: #{tpu_custom_call.1}
  #allocation0 [shape = 'u32[]', space=smem, size = 0x4, offset = 0x4, fixed_abs, tag = 'smem constant byte address 0x4 - core index']
  #allocation1 [shape = 'u32[144,128]{1,0:T(1,128)}', space=vmem, size = 0x12000, scoped, tag = 'internal scratch']
  #allocation2 [shape = 'f32[80,128]{1,0:T(8,128)}', space=vmem, size = 0xa000, scoped, tag = 'scratch operand']
  %s0 = inlined_call_operand.vmem [shape: f32[80,8], index: 0, kind: input, shape index: {}]
  %s1 = inlined_call_operand.vmem [shape: f32[8,128], index: 1, kind: input, shape index: {}]
  %s2 = inlined_call_operand.vmem [shape: f32[32,128], index: 2, kind: input, shape index: {}]
  %s3 = inlined_call_operand.vmem [shape: f32[1,128], index: 3, kind: input, shape index: {}]
  %s4 = inlined_call_operand.vmem [shape: f32[32,8], index: 4, kind: input, shape index: {}]
  %s5 = inlined_call_operand.vmem [shape: f32[1,8], index: 5, kind: input, shape index: {}]
  %s6 = inlined_call_operand.hbm [shape: f32[8,8], index: 6, kind: output, shape index: {}]
  %s7 = sld [smem:[#allocation0]]
  $region34: #{tpu_custom_call.1} parent=0
    _
  %s9 = ssub.s32 1, %s7
  %s10 = scalar_select 0, %s9, %s7
  $region1: #{tpu_custom_call.1} parent=0
    #allocation3 [shape = 'u8[4096]{0}', space=vmem, size = 0x1000, scoped, tag = 'output window, operand 0, single buffered']
    #allocation4 [shape = 's32[1]{0}', space=sflag, size = 0x4, scoped, tag = 'scoped memory for tpu_custom_call.1']
    %11 = vsyncpa [#allocation4], 0
    // Predicated region
    $region2: #{tpu_custom_call.1} parent=1 // pred_check
      _
    $region3: #{tpu_custom_call.1} parent=1 // pred_check_branch
      %13 = sbr.rel (0) target = $region5
    $region4: #{tpu_custom_call.1} parent=1 // pred_region
      _
    $region5: #{tpu_custom_call.1} parent=1 // pred_fallthru
      _
    // Predicated region
    $region6: #{tpu_custom_call.1} parent=1 // pred_check
      _
    $region7: #{tpu_custom_call.1} parent=1 // pred_check_branch
      %15 = sbr.rel (0) target = $region9
    $region8: #{tpu_custom_call.1} parent=1 // pred_region
      _
    $region9: #{tpu_custom_call.1} parent=1 // pred_fallthru
      _
    // Predicated region
    $region10: #{tpu_custom_call.1} parent=1 // pred_check
      _
    $region11: #{tpu_custom_call.1} parent=1 // pred_check_branch
      %17 = sbr.rel (0) target = $region13
    $region12: #{tpu_custom_call.1} parent=1 // pred_region
      _
    $region13: #{tpu_custom_call.1} parent=1 // pred_fallthru
      _
    // Predicated region
    $region14: #{tpu_custom_call.1} parent=1 // pred_check
      _
    $region15: #{tpu_custom_call.1} parent=1 // pred_check_branch
      %19 = sbr.rel (0) target = $region17
    $region16: #{tpu_custom_call.1} parent=1 // pred_region
      _
    $region17: #{tpu_custom_call.1} parent=1 // pred_fallthru
      _
    // Predicated region
    $region18: #{tpu_custom_call.1} parent=1 // pred_check
      _
    $region19: #{tpu_custom_call.1} parent=1 // pred_check_branch
      %21 = sbr.rel (0) target = $region21
    $region20: #{tpu_custom_call.1} parent=1 // pred_region
      _
    $region21: #{tpu_custom_call.1} parent=1 // pred_fallthru
      _
    // Predicated region
    $region22: #{tpu_custom_call.1} parent=1 // pred_check
      _
    $region23: #{tpu_custom_call.1} parent=1 // pred_check_branch
      %23 = sbr.rel (0) target = $region25
    $region24: #{tpu_custom_call.1} parent=1 // pred_region
      _
    $region25: #{tpu_custom_call.1} parent=1 // pred_fallthru
      _
    %v24 = vld [vmem:[%s0] sm:$0xff]
    %v25 = vld [vmem:[%s0 + $0x8] sm:$0xff]
    %v26 = vld [vmem:[%s0 + $0x10] sm:$0xff]
    %v27 = vld [vmem:[%s0 + $0x18] sm:$0xff]
    %v28 = vld [vmem:[%s0 + $0x20] sm:$0xff]
    %v29 = vld [vmem:[%s0 + $0x28] sm:$0xff]
    %v30 = vld [vmem:[%s0 + $0x30] sm:$0xff]
    %v31 = vld [vmem:[%s0 + $0x38] sm:$0xff]
    %v32 = vld [vmem:[%s0 + $0x40] sm:$0xff]
    %v33 = vld [vmem:[%s0 + $0x48] sm:$0xff]
    %v34 = vld [vmem:[%s1] sm:$0xff]
    %v35 = vld [vmem:[%s3] sm:$0x1]
    %v37 = vlaneseq
    %v38 = vshrl.u32 %v37, 7
    %v39 = vsub.s32 0, %v38
    %v40 = vrot.slane %v35, %v39
    %vm42 = vcmask 64512
    %v44 = vsel %vm42, %v24, 0
    %v47 = vsel %vm42, %v25, 0
    %v50 = vsel %vm42, %v26, 0
    %v53 = vsel %vm42, %v27, 0
    %v56 = vsel %vm42, %v28, 0
    %v59 = vsel %vm42, %v29, 0
    %v62 = vsel %vm42, %v30, 0
    %v65 = vsel %vm42, %v31, 0
    %v68 = vsel %vm42, %v32, 0
    %v71 = vsel %vm42, %v33, 0
    %73 = vmatprep.subr.mxu0 0.0
    %74 = vmatpush1.msra.mxu0 %v34
    %75 = vmatprep.subr.mxu0 0.0
    %76 = vmatpush1.msra.mxu0 0.0
    %77 = vmatprep.subr.mxu0 0.0
    %78 = vmatpush1.msra.mxu0 0.0
    %79 = vmatprep.subr.mxu0 0.0
    %80 = vmatpush1.msra.mxu0 0.0
    %81 = vmatprep.subr.mxu0 0.0
    %82 = vmatpush1.msra.mxu0 0.0
    %83 = vmatprep.subr.mxu0 0.0
    %84 = vmatpush1.msra.mxu0 0.0
    %85 = vmatprep.subr.mxu0 0.0
    %86 = vmatpush1.msra.mxu0 0.0
    %87 = vmatprep.subr.mxu0 0.0
    %88 = vmatpush1.msra.mxu0 0.0
    %89 = vmatprep.subr.mxu0 0.0
    %90 = vmatpush1.msra.mxu0 0.0
    %91 = vmatprep.subr.mxu0 0.0
    %92 = vmatpush1.msra.mxu0 0.0
    %93 = vmatprep.subr.mxu0 0.0
    %94 = vmatpush1.msra.mxu0 0.0
    %95 = vmatprep.subr.mxu0 0.0
    %96 = vmatpush1.msra.mxu0 0.0
    %97 = vmatprep.subr.mxu0 0.0
    %98 = vmatpush1.msra.mxu0 0.0
    %99 = vmatprep.subr.mxu0 0.0
    %100 = vmatpush1.msra.mxu0 0.0
    %101 = vmatprep.subr.mxu0 0.0
    %102 = vmatpush1.msra.mxu0 0.0
    %103 = vmatprep.subr.mxu0 0.0
    %104 = vmatpush1.msra.mxu0 0.0
    %105 = vmatprep.subr.mxu0 0.0
    %106 = vmatpush1.msra.mxu0 0.0
    %107 = vmatprep.subr.mxu0 0.0
    %108 = vmatpush1.msra.mxu0 0.0
    %109 = vmatprep.subr.mxu0 0.0
    %110 = vmatpush1.msra.mxu0 0.0
    %111 = vmatprep.subr.mxu0 0.0
    %112 = vmatpush1.msra.mxu0 0.0
    %113 = vmatprep.subr.mxu0 0.0
    %114 = vmatpush1.msra.mxu0 0.0
    %115 = vmatprep.subr.mxu0 0.0
    %116 = vmatpush1.msra.mxu0 0.0
    %117 = vmatprep.subr.mxu0 0.0
    %118 = vmatpush1.msra.mxu0 0.0
    %119 = vmatprep.subr.mxu0 0.0
    %120 = vmatpush1.msra.mxu0 0.0
    %121 = vmatprep.subr.mxu0 0.0
    %122 = vmatpush1.msra.mxu0 0.0
    %123 = vmatprep.subr.mxu0 0.0
    %124 = vmatpush1.msra.mxu0 0.0
    %125 = vmatprep.subr.mxu0 0.0
    %126 = vmatpush1.msra.mxu0 0.0
    %127 = vmatprep.subr.mxu0 0.0
    %128 = vmatpush1.msra.mxu0 0.0
    %129 = vmatprep.subr.mxu0 0.0
    %130 = vmatpush1.msra.mxu0 0.0
    %131 = vmatprep.subr.mxu0 0.0
    %132 = vmatpush1.msra.mxu0 0.0
    %133 = vmatprep.subr.mxu0 0.0
    %134 = vmatpush1.msra.mxu0 0.0
    %135 = vmatprep.subr.mxu0 0.0
    %136 = vmatpush1.msra.mxu0 0.0
    %137 = vmatprep.mubr.f32.mxu0 0.0
    %138 = vmatmul.mubr.f32.gmra.mrb[0].mxu0 %v44
    %v139 = vpop.f32.mrb[0].mxu0
    %v140 = vadd.f32 %v40, %v139
    %v141 = vpop.f32.mrb[0].mxu0
    %142 = vmatprep.mubr.f32.mxu0 0.0
    %143 = vmatmul.mubr.f32.gmra.mrb[0].mxu0 %v47
    %v144 = vpop.f32.mrb[0].mxu0
    %v145 = vadd.f32 %v40, %v144
    %v146 = vpop.f32.mrb[0].mxu0
    %147 = vmatprep.mubr.f32.mxu0 0.0
    %148 = vmatmul.mubr.f32.gmra.mrb[0].mxu0 %v50
    %v149 = vpop.f32.mrb[0].mxu0
    %v150 = vadd.f32 %v40, %v149
    %v151 = vpop.f32.mrb[0].mxu0
    %152 = vmatprep.mubr.f32.mxu0 0.0
    %153 = vmatmul.mubr.f32.gmra.mrb[0].mxu0 %v53
    %v154 = vpop.f32.mrb[0].mxu0
    %v155 = vadd.f32 %v40, %v154
    %v156 = vpop.f32.mrb[0].mxu0
    %157 = vmatprep.mubr.f32.mxu0 0.0
    %158 = vmatmul.mubr.f32.gmra.mrb[0].mxu0 %v56
    %v159 = vpop.f32.mrb[0].mxu0
    %v160 = vadd.f32 %v40, %v159
    %v161 = vpop.f32.mrb[0].mxu0
    %162 = vmatprep.mubr.f32.mxu0 0.0
    %163 = vmatmul.mubr.f32.gmra.mrb[0].mxu0 %v59
    %v164 = vpop.f32.mrb[0].mxu0
    %v165 = vadd.f32 %v40, %v164
    %v166 = vpop.f32.mrb[0].mxu0
    %167 = vmatprep.mubr.f32.mxu0 0.0
    %168 = vmatmul.mubr.f32.gmra.mrb[0].mxu0 %v62
    %v169 = vpop.f32.mrb[0].mxu0
    %v170 = vadd.f32 %v40, %v169
    %v171 = vpop.f32.mrb[0].mxu0
    %172 = vmatprep.mubr.f32.mxu0 0.0
    %173 = vmatmul.mubr.f32.gmra.mrb[0].mxu0 %v65
    %v174 = vpop.f32.mrb[0].mxu0
    %v175 = vadd.f32 %v40, %v174
    %v176 = vpop.f32.mrb[0].mxu0
    %177 = vmatprep.mubr.f32.mxu0 0.0
    %178 = vmatmul.mubr.f32.gmra.mrb[0].mxu0 %v68
    %v179 = vpop.f32.mrb[0].mxu0
    %v180 = vadd.f32 %v40, %v179
    %v181 = vpop.f32.mrb[0].mxu0
    %182 = vmatprep.mubr.f32.mxu0 0.0
    %183 = vmatmul.mubr.f32.gmra.mrb[0].mxu0 %v71
    %v184 = vpop.f32.mrb[0].mxu0
    %v185 = vadd.f32 %v40, %v184
    %v186 = vpop.f32.mrb[0].mxu0
    %187 = vdwg.mxu0
    %188 = vst [vmem:[#allocation2] sm:$0xff] %v140
    %189 = vst [vmem:[#allocation2 + $0x8] sm:$0xff] %v145
    %190 = vst [vmem:[#allocation2 + $0x10] sm:$0xff] %v150
    %191 = vst [vmem:[#allocation2 + $0x18] sm:$0xff] %v155
    %192 = vst [vmem:[#allocation2 + $0x20] sm:$0xff] %v160
    %193 = vst [vmem:[#allocation2 + $0x28] sm:$0xff] %v165
    %194 = vst [vmem:[#allocation2 + $0x30] sm:$0xff] %v170
    %195 = vst [vmem:[#allocation2 + $0x38] sm:$0xff] %v175
    %196 = vst [vmem:[#allocation2 + $0x40] sm:$0xff] %v180
    %197 = vst [vmem:[#allocation2 + $0x48] sm:$0xff] %v185
    %v198 = vld [vmem:[%s2] sm:$0xff]
    %v199 = vld [vmem:[%s2 + $0x8] sm:$0xff]
    %v200 = vld [vmem:[%s2 + $0x10] sm:$0xff]
    %v201 = vld [vmem:[%s2 + $0x18] sm:$0xff]
    %v202 = vld [vmem:[#allocation2] sm:$0xff]
    %vm203 = vcmask 261120
    %v205 = vsel %vm203, 0.0, 0
    %207 = vmatprep.subr.mxu0 0.0
    %208 = vmatpush1.msra.mxu0 %v198
    %209 = vmatprep.subr.mxu0 0.0
    %210 = vmatpush1.msra.mxu0 %v199
    %211 = vmatprep.subr.mxu0 0.0
    %212 = vmatpush1.msra.mxu0 %v200
    %213 = vmatprep.subr.mxu0 0.0
    %214 = vmatpush1.msra.mxu0 %v201
    %215 = vmatprep.subr.mxu0 0.0
    %216 = vmatpush1.msra.mxu0 0.0
    %217 = vmatprep.subr.mxu0 0.0
    %218 = vmatpush1.msra.mxu0 0.0
    %219 = vmatprep.subr.mxu0 0.0
    %220 = vmatpush1.msra.mxu0 0.0
    %221 = vmatprep.subr.mxu0 0.0
    %222 = vmatpush1.msra.mxu0 0.0
    %223 = vmatprep.subr.mxu0 0.0
    %224 = vmatpush1.msra.mxu0 0.0
    %225 = vmatprep.subr.mxu0 0.0
    %226 = vmatpush1.msra.mxu0 0.0
    %227 = vmatprep.subr.mxu0 0.0
    %228 = vmatpush1.msra.mxu0 0.0
    %229 = vmatprep.subr.mxu0 0.0
    %230 = vmatpush1.msra.mxu0 0.0
    %231 = vmatprep.subr.mxu0 0.0
    %232 = vmatpush1.msra.mxu0 0.0
    %233 = vmatprep.subr.mxu0 0.0
    %234 = vmatpush1.msra.mxu0 0.0
    %235 = vmatprep.subr.mxu0 0.0
    %236 = vmatpush1.msra.mxu0 0.0
    %237 = vmatprep.subr.mxu0 0.0
    %238 = vmatpush1.msra.mxu0 0.0
    %239 = vmatprep.subr.mxu0 0.0
    %240 = vmatpush1.msra.mxu0 0.0
    %241 = vmatprep.subr.mxu0 0.0
    %242 = vmatpush1.msra.mxu0 0.0
    %243 = vmatprep.subr.mxu0 0.0
    %244 = vmatpush1.msra.mxu0 0.0
    %245 = vmatprep.subr.mxu0 0.0
    %246 = vmatpush1.msra.mxu0 0.0
    %247 = vmatprep.subr.mxu0 0.0
    %248 = vmatpush1.msra.mxu0 0.0
    %249 = vmatprep.subr.mxu0 0.0
    %250 = vmatpush1.msra.mxu0 0.0
    %251 = vmatprep.subr.mxu0 0.0
    %252 = vmatpush1.msra.mxu0 0.0
    %253 = vmatprep.subr.mxu0 0.0
    %254 = vmatpush1.msra.mxu0 0.0
    %255 = vmatprep.subr.mxu0 0.0
    %256 = vmatpush1.msra.mxu0 0.0
    %257 = vmatprep.subr.mxu0 0.0
    %258 = vmatpush1.msra.mxu0 0.0
    %259 = vmatprep.subr.mxu0 0.0
    %260 = vmatpush1.msra.mxu0 0.0
    %261 = vmatprep.subr.mxu0 0.0
    %262 = vmatpush1.msra.mxu0 0.0
    %263 = vmatprep.subr.mxu0 0.0
    %264 = vmatpush1.msra.mxu0 0.0
    %265 = vmatprep.subr.mxu0 0.0
    %266 = vmatpush1.msra.mxu0 0.0
    %267 = vmatprep.subr.mxu0 0.0
    %268 = vmatpush1.msra.mxu0 0.0
    %269 = vmatprep.subr.mxu0 0.0
    %270 = vmatpush1.msra.mxu0 0.0
    %271 = vmatprep.mubr.f32.mxu0 0.0
    %272 = vmatmul.mubr.f32.gmra.mrb[0].mxu0 %v205
    %v273 = vpop.f32.mrb[0].mxu0
    %v274 = vadd.f32 0.0, %v273
    %v275 = vpop.f32.mrb[0].mxu0
    %276 = vdwg.mxu0
    %v277 = vadd.f32 %v202, %v274
    %v278 = vxor.u32 %v277, 2147483648
    %v279 = vmul.f32 %v278, 1.442695
    %v280 = vpow.pop %v279
    %v281 = vadd.f32 %v280, 1.0
    %v282 = vrcp.pop %v281
    %v283 = vmul.f32 1.0, %v282
    %v284 = vtanh.pop %v277
    %v285 = vmul.f32 %v283, 0.0
    %287 = vrot.lane.b32.xlu0 %v284, 64
    %v288 = vpop.permute.xlu0 %287
    %v290 = vmul.f32 %v283, %v288
    %292 = vrot.lane.b32.xlu0 %v290, 32
    %v293 = vpop.permute.xlu0 %292
    %v295 = vadd.f32 %v285, %v293
    %v296 = vtanh.pop %v295
    %298 = vrot.lane.b32.xlu0 %v296, 64
    %v299 = vpop.permute.xlu0 %298
    %v301 = vmul.f32 %v283, %v299
    %s302 = scalar_lea.vmem [#allocation2], 8
    %v303 = vld [vmem:[%s302] sm:$0xff]
    %305 = vrot.lane.b32.xlu0 %v301, 32
    %v306 = vpop.permute.xlu0 %305
    %v307 = vsel %vm203, %v306, 0
    %309 = vmatprep.subr.mxu0 0.0
    %310 = vmatpush1.msra.mxu0 %v198
    %311 = vmatprep.subr.mxu0 0.0
    %312 = vmatpush1.msra.mxu0 %v199
    %313 = vmatprep.subr.mxu0 0.0
    %314 = vmatpush1.msra.mxu0 %v200
    %315 = vmatprep.subr.mxu0 0.0
    %316 = vmatpush1.msra.mxu0 %v201
    %317 = vmatprep.subr.mxu0 0.0
    %318 = vmatpush1.msra.mxu0 0.0
    %319 = vmatprep.subr.mxu0 0.0
    %320 = vmatpush1.msra.mxu0 0.0
    %321 = vmatprep.subr.mxu0 0.0
    %322 = vmatpush1.msra.mxu0 0.0
    %323 = vmatprep.subr.mxu0 0.0
    %324 = vmatpush1.msra.mxu0 0.0
    %325 = vmatprep.subr.mxu0 0.0
    %326 = vmatpush1.msra.mxu0 0.0
    %327 = vmatprep.subr.mxu0 0.0
    %328 = vmatpush1.msra.mxu0 0.0
    %329 = vmatprep.subr.mxu0 0.0
    %330 = vmatpush1.msra.mxu0 0.0
    %331 = vmatprep.subr.mxu0 0.0
    %332 = vmatpush1.msra.mxu0 0.0
    %333 = vmatprep.subr.mxu0 0.0
    %334 = vmatpush1.msra.mxu0 0.0
    %335 = vmatprep.subr.mxu0 0.0
    %336 = vmatpush1.msra.mxu0 0.0
    %337 = vmatprep.subr.mxu0 0.0
    %338 = vmatpush1.msra.mxu0 0.0
    %339 = vmatprep.subr.mxu0 0.0
    %340 = vmatpush1.msra.mxu0 0.0
    %341 = vmatprep.subr.mxu0 0.0
    %342 = vmatpush1.msra.mxu0 0.0
    %343 = vmatprep.subr.mxu0 0.0
    %344 = vmatpush1.msra.mxu0 0.0
    %345 = vmatprep.subr.mxu0 0.0
    %346 = vmatpush1.msra.mxu0 0.0
    %347 = vmatprep.subr.mxu0 0.0
    %348 = vmatpush1.msra.mxu0 0.0
    %349 = vmatprep.subr.mxu0 0.0
    %350 = vmatpush1.msra.mxu0 0.0
    %351 = vmatprep.subr.mxu0 0.0
    %352 = vmatpush1.msra.mxu0 0.0
    %353 = vmatprep.subr.mxu0 0.0
    %354 = vmatpush1.msra.mxu0 0.0
    %355 = vmatprep.subr.mxu0 0.0
    %356 = vmatpush1.msra.mxu0 0.0
    %357 = vmatprep.subr.mxu0 0.0
    %358 = vmatpush1.msra.mxu0 0.0
    %359 = vmatprep.subr.mxu0 0.0
    %360 = vmatpush1.msra.mxu0 0.0
    %361 = vmatprep.subr.mxu0 0.0
    %362 = vmatpush1.msra.mxu0 0.0
    %363 = vmatprep.subr.mxu0 0.0
    %364 = vmatpush1.msra.mxu0 0.0
    %365 = vmatprep.subr.mxu0 0.0
    %366 = vmatpush1.msra.mxu0 0.0
    %367 = vmatprep.subr.mxu0 0.0
    %368 = vmatpush1.msra.mxu0 0.0
    %369 = vmatprep.subr.mxu0 0.0
    %370 = vmatpush1.msra.mxu0 0.0
    %371 = vmatprep.subr.mxu0 0.0
    %372 = vmatpush1.msra.mxu0 0.0
    %373 = vmatprep.mubr.f32.mxu0 0.0
    %374 = vmatmul.mubr.f32.gmra.mrb[0].mxu0 %v307
    %v375 = vpop.f32.mrb[0].mxu0
    %v376 = vadd.f32 0.0, %v375
    %v377 = vpop.f32.mrb[0].mxu0
    %378 = vdwg.mxu0
    %v379 = vadd.f32 %v303, %v376
    %v380 = vxor.u32 %v379, 2147483648
    %v381 = vmul.f32 %v380, 1.442695
    %v382 = vpow.pop %v381
    %v383 = vadd.f32 %v382, 1.0
    %v384 = vrcp.pop %v383
    %v385 = vmul.f32 1.0, %v384
    %v386 = vtanh.pop %v379
    %v387 = vmul.f32 %v385, %v295
    %389 = vrot.lane.b32.xlu0 %v386, 64
    %v390 = vpop.permute.xlu0 %389
    %v392 = vmul.f32 %v385, %v390
    %394 = vrot.lane.b32.xlu0 %v392, 32
    %v395 = vpop.permute.xlu0 %394
    %v397 = vadd.f32 %v387, %v395
    %v398 = vtanh.pop %v397
    %400 = vrot.lane.b32.xlu0 %v398, 64
    %v401 = vpop.permute.xlu0 %400
    %v403 = vmul.f32 %v385, %v401
    %s404 = scalar_lea.vmem [#allocation2], 16
    %v405 = vld [vmem:[%s404] sm:$0xff]
    %407 = vrot.lane.b32.xlu0 %v403, 32
    %v408 = vpop.permute.xlu0 %407
    %v409 = vsel %vm203, %v408, 0
    %411 = vmatprep.subr.mxu0 0.0
    %412 = vmatpush1.msra.mxu0 %v198
    %413 = vmatprep.subr.mxu0 0.0
    %414 = vmatpush1.msra.mxu0 %v199
    %415 = vmatprep.subr.mxu0 0.0
    %416 = vmatpush1.msra.mxu0 %v200
    %417 = vmatprep.subr.mxu0 0.0
    %418 = vmatpush1.msra.mxu0 %v201
    %419 = vmatprep.subr.mxu0 0.0
    %420 = vmatpush1.msra.mxu0 0.0
    %421 = vmatprep.subr.mxu0 0.0
    %422 = vmatpush1.msra.mxu0 0.0
    %423 = vmatprep.subr.mxu0 0.0
    %424 = vmatpush1.msra.mxu0 0.0
    %425 = vmatprep.subr.mxu0 0.0
    %426 = vmatpush1.msra.mxu0 0.0
    %427 = vmatprep.subr.mxu0 0.0
    %428 = vmatpush1.msra.mxu0 0.0
    %429 = vmatprep.subr.mxu0 0.0
    %430 = vmatpush1.msra.mxu0 0.0
    %431 = vmatprep.subr.mxu0 0.0
    %432 = vmatpush1.msra.mxu0 0.0
    %433 = vmatprep.subr.mxu0 0.0
    %434 = vmatpush1.msra.mxu0 0.0
    %435 = vmatprep.subr.mxu0 0.0
    %436 = vmatpush1.msra.mxu0 0.0
    %437 = vmatprep.subr.mxu0 0.0
    %438 = vmatpush1.msra.mxu0 0.0
    %439 = vmatprep.subr.mxu0 0.0
    %440 = vmatpush1.msra.mxu0 0.0
    %441 = vmatprep.subr.mxu0 0.0
    %442 = vmatpush1.msra.mxu0 0.0
    %443 = vmatprep.subr.mxu0 0.0
    %444 = vmatpush1.msra.mxu0 0.0
    %445 = vmatprep.subr.mxu0 0.0
    %446 = vmatpush1.msra.mxu0 0.0
    %447 = vmatprep.subr.mxu0 0.0
    %448 = vmatpush1.msra.mxu0 0.0
    %449 = vmatprep.subr.mxu0 0.0
    %450 = vmatpush1.msra.mxu0 0.0
    %451 = vmatprep.subr.mxu0 0.0
    %452 = vmatpush1.msra.mxu0 0.0
    %453 = vmatprep.subr.mxu0 0.0
    %454 = vmatpush1.msra.mxu0 0.0
    %455 = vmatprep.subr.mxu0 0.0
    %456 = vmatpush1.msra.mxu0 0.0
    %457 = vmatprep.subr.mxu0 0.0
    %458 = vmatpush1.msra.mxu0 0.0
    %459 = vmatprep.subr.mxu0 0.0
    %460 = vmatpush1.msra.mxu0 0.0
    %461 = vmatprep.subr.mxu0 0.0
    %462 = vmatpush1.msra.mxu0 0.0
    %463 = vmatprep.subr.mxu0 0.0
    %464 = vmatpush1.msra.mxu0 0.0
    %465 = vmatprep.subr.mxu0 0.0
    %466 = vmatpush1.msra.mxu0 0.0
    %467 = vmatprep.subr.mxu0 0.0
    %468 = vmatpush1.msra.mxu0 0.0
    %469 = vmatprep.subr.mxu0 0.0
    %470 = vmatpush1.msra.mxu0 0.0
    %471 = vmatprep.subr.mxu0 0.0
    %472 = vmatpush1.msra.mxu0 0.0
    %473 = vmatprep.subr.mxu0 0.0
    %474 = vmatpush1.msra.mxu0 0.0
    %475 = vmatprep.mubr.f32.mxu0 0.0
    %476 = vmatmul.mubr.f32.gmra.mrb[0].mxu0 %v409
    %v477 = vpop.f32.mrb[0].mxu0
    %v478 = vadd.f32 0.0, %v477
    %v479 = vpop.f32.mrb[0].mxu0
    %480 = vdwg.mxu0
    %v481 = vadd.f32 %v405, %v478
    %v482 = vxor.u32 %v481, 2147483648
    %v483 = vmul.f32 %v482, 1.442695
    %v484 = vpow.pop %v483
    %v485 = vadd.f32 %v484, 1.0
    %v486 = vrcp.pop %v485
    %v487 = vmul.f32 1.0, %v486
    %v488 = vtanh.pop %v481
    %v489 = vmul.f32 %v487, %v397
    %491 = vrot.lane.b32.xlu0 %v488, 64
    %v492 = vpop.permute.xlu0 %491
    %v494 = vmul.f32 %v487, %v492
    %496 = vrot.lane.b32.xlu0 %v494, 32
    %v497 = vpop.permute.xlu0 %496
    %v499 = vadd.f32 %v489, %v497
    %v500 = vtanh.pop %v499
    %502 = vrot.lane.b32.xlu0 %v500, 64
    %v503 = vpop.permute.xlu0 %502
    %v505 = vmul.f32 %v487, %v503
    %s506 = scalar_lea.vmem [#allocation2], 24
    %v507 = vld [vmem:[%s506] sm:$0xff]
    %509 = vrot.lane.b32.xlu0 %v505, 32
    %v510 = vpop.permute.xlu0 %509
    %v511 = vsel %vm203, %v510, 0
    %513 = vmatprep.subr.mxu0 0.0
    %514 = vmatpush1.msra.mxu0 %v198
    %515 = vmatprep.subr.mxu0 0.0
    %516 = vmatpush1.msra.mxu0 %v199
    %517 = vmatprep.subr.mxu0 0.0
    %518 = vmatpush1.msra.mxu0 %v200
    %519 = vmatprep.subr.mxu0 0.0
    %520 = vmatpush1.msra.mxu0 %v201
    %521 = vmatprep.subr.mxu0 0.0
    %522 = vmatpush1.msra.mxu0 0.0
    %523 = vmatprep.subr.mxu0 0.0
    %524 = vmatpush1.msra.mxu0 0.0
    %525 = vmatprep.subr.mxu0 0.0
    %526 = vmatpush1.msra.mxu0 0.0
    %527 = vmatprep.subr.mxu0 0.0
    %528 = vmatpush1.msra.mxu0 0.0
    %529 = vmatprep.subr.mxu0 0.0
    %530 = vmatpush1.msra.mxu0 0.0
    %531 = vmatprep.subr.mxu0 0.0
    %532 = vmatpush1.msra.mxu0 0.0
    %533 = vmatprep.subr.mxu0 0.0
    %534 = vmatpush1.msra.mxu0 0.0
    %535 = vmatprep.subr.mxu0 0.0
    %536 = vmatpush1.msra.mxu0 0.0
    %537 = vmatprep.subr.mxu0 0.0
    %538 = vmatpush1.msra.mxu0 0.0
    %539 = vmatprep.subr.mxu0 0.0
    %540 = vmatpush1.msra.mxu0 0.0
    %541 = vmatprep.subr.mxu0 0.0
    %542 = vmatpush1.msra.mxu0 0.0
    %543 = vmatprep.subr.mxu0 0.0
    %544 = vmatpush1.msra.mxu0 0.0
    %545 = vmatprep.subr.mxu0 0.0
    %546 = vmatpush1.msra.mxu0 0.0
    %547 = vmatprep.subr.mxu0 0.0
    %548 = vmatpush1.msra.mxu0 0.0
    %549 = vmatprep.subr.mxu0 0.0
    %550 = vmatpush1.msra.mxu0 0.0
    %551 = vmatprep.subr.mxu0 0.0
    %552 = vmatpush1.msra.mxu0 0.0
    %553 = vmatprep.subr.mxu0 0.0
    %554 = vmatpush1.msra.mxu0 0.0
    %555 = vmatprep.subr.mxu0 0.0
    %556 = vmatpush1.msra.mxu0 0.0
    %557 = vmatprep.subr.mxu0 0.0
    %558 = vmatpush1.msra.mxu0 0.0
    %559 = vmatprep.subr.mxu0 0.0
    %560 = vmatpush1.msra.mxu0 0.0
    %561 = vmatprep.subr.mxu0 0.0
    %562 = vmatpush1.msra.mxu0 0.0
    %563 = vmatprep.subr.mxu0 0.0
    %564 = vmatpush1.msra.mxu0 0.0
    %565 = vmatprep.subr.mxu0 0.0
    %566 = vmatpush1.msra.mxu0 0.0
    %567 = vmatprep.subr.mxu0 0.0
    %568 = vmatpush1.msra.mxu0 0.0
    %569 = vmatprep.subr.mxu0 0.0
    %570 = vmatpush1.msra.mxu0 0.0
    %571 = vmatprep.subr.mxu0 0.0
    %572 = vmatpush1.msra.mxu0 0.0
    %573 = vmatprep.subr.mxu0 0.0
    %574 = vmatpush1.msra.mxu0 0.0
    %575 = vmatprep.subr.mxu0 0.0
    %576 = vmatpush1.msra.mxu0 0.0
    %577 = vmatprep.mubr.f32.mxu0 0.0
    %578 = vmatmul.mubr.f32.gmra.mrb[0].mxu0 %v511
    %v579 = vpop.f32.mrb[0].mxu0
    %v580 = vadd.f32 0.0, %v579
    %v581 = vpop.f32.mrb[0].mxu0
    %582 = vdwg.mxu0
    %v583 = vadd.f32 %v507, %v580
    %v584 = vxor.u32 %v583, 2147483648
    %v585 = vmul.f32 %v584, 1.442695
    %v586 = vpow.pop %v585
    %v587 = vadd.f32 %v586, 1.0
    %v588 = vrcp.pop %v587
    %v589 = vmul.f32 1.0, %v588
    %v590 = vtanh.pop %v583
    %v591 = vmul.f32 %v589, %v499
    %593 = vrot.lane.b32.xlu0 %v590, 64
    %v594 = vpop.permute.xlu0 %593
    %v596 = vmul.f32 %v589, %v594
    %598 = vrot.lane.b32.xlu0 %v596, 32
    %v599 = vpop.permute.xlu0 %598
    %v601 = vadd.f32 %v591, %v599
    %v602 = vtanh.pop %v601
    %604 = vrot.lane.b32.xlu0 %v602, 64
    %v605 = vpop.permute.xlu0 %604
    %v607 = vmul.f32 %v589, %v605
    %s608 = scalar_lea.vmem [#allocation2], 32
    %v609 = vld [vmem:[%s608] sm:$0xff]
    %611 = vrot.lane.b32.xlu0 %v607, 32
    %v612 = vpop.permute.xlu0 %611
    %v613 = vsel %vm203, %v612, 0
    %615 = vmatprep.subr.mxu0 0.0
    %616 = vmatpush1.msra.mxu0 %v198
    %617 = vmatprep.subr.mxu0 0.0
    %618 = vmatpush1.msra.mxu0 %v199
    %619 = vmatprep.subr.mxu0 0.0
    %620 = vmatpush1.msra.mxu0 %v200
    %621 = vmatprep.subr.mxu0 0.0
    %622 = vmatpush1.msra.mxu0 %v201
    %623 = vmatprep.subr.mxu0 0.0
    %624 = vmatpush1.msra.mxu0 0.0
    %625 = vmatprep.subr.mxu0 0.0
    %626 = vmatpush1.msra.mxu0 0.0
    %627 = vmatprep.subr.mxu0 0.0
    %628 = vmatpush1.msra.mxu0 0.0
    %629 = vmatprep.subr.mxu0 0.0
    %630 = vmatpush1.msra.mxu0 0.0
    %631 = vmatprep.subr.mxu0 0.0
    %632 = vmatpush1.msra.mxu0 0.0
    %633 = vmatprep.subr.mxu0 0.0
    %634 = vmatpush1.msra.mxu0 0.0
    %635 = vmatprep.subr.mxu0 0.0
    %636 = vmatpush1.msra.mxu0 0.0
    %637 = vmatprep.subr.mxu0 0.0
    %638 = vmatpush1.msra.mxu0 0.0
    %639 = vmatprep.subr.mxu0 0.0
    %640 = vmatpush1.msra.mxu0 0.0
    %641 = vmatprep.subr.mxu0 0.0
    %642 = vmatpush1.msra.mxu0 0.0
    %643 = vmatprep.subr.mxu0 0.0
    %644 = vmatpush1.msra.mxu0 0.0
    %645 = vmatprep.subr.mxu0 0.0
    %646 = vmatpush1.msra.mxu0 0.0
    %647 = vmatprep.subr.mxu0 0.0
    %648 = vmatpush1.msra.mxu0 0.0
    %649 = vmatprep.subr.mxu0 0.0
    %650 = vmatpush1.msra.mxu0 0.0
    %651 = vmatprep.subr.mxu0 0.0
    %652 = vmatpush1.msra.mxu0 0.0
    %653 = vmatprep.subr.mxu0 0.0
    %654 = vmatpush1.msra.mxu0 0.0
    %655 = vmatprep.subr.mxu0 0.0
    %656 = vmatpush1.msra.mxu0 0.0
    %657 = vmatprep.subr.mxu0 0.0
    %658 = vmatpush1.msra.mxu0 0.0
    %659 = vmatprep.subr.mxu0 0.0
    %660 = vmatpush1.msra.mxu0 0.0
    %661 = vmatprep.subr.mxu0 0.0
    %662 = vmatpush1.msra.mxu0 0.0
    %663 = vmatprep.subr.mxu0 0.0
    %664 = vmatpush1.msra.mxu0 0.0
    %665 = vmatprep.subr.mxu0 0.0
    %666 = vmatpush1.msra.mxu0 0.0
    %667 = vmatprep.subr.mxu0 0.0
    %668 = vmatpush1.msra.mxu0 0.0
    %669 = vmatprep.subr.mxu0 0.0
    %670 = vmatpush1.msra.mxu0 0.0
    %671 = vmatprep.subr.mxu0 0.0
    %672 = vmatpush1.msra.mxu0 0.0
    %673 = vmatprep.subr.mxu0 0.0
    %674 = vmatpush1.msra.mxu0 0.0
    %675 = vmatprep.subr.mxu0 0.0
    %676 = vmatpush1.msra.mxu0 0.0
    %677 = vmatprep.subr.mxu0 0.0
    %678 = vmatpush1.msra.mxu0 0.0
    %679 = vmatprep.mubr.f32.mxu0 0.0
    %680 = vmatmul.mubr.f32.gmra.mrb[0].mxu0 %v613
    %v681 = vpop.f32.mrb[0].mxu0
    %v682 = vadd.f32 0.0, %v681
    %v683 = vpop.f32.mrb[0].mxu0
    %684 = vdwg.mxu0
    %v685 = vadd.f32 %v609, %v682
    %v686 = vxor.u32 %v685, 2147483648
    %v687 = vmul.f32 %v686, 1.442695
    %v688 = vpow.pop %v687
    %v689 = vadd.f32 %v688, 1.0
    %v690 = vrcp.pop %v689
    %v691 = vmul.f32 1.0, %v690
    %v692 = vtanh.pop %v685
    %v693 = vmul.f32 %v691, %v601
    %695 = vrot.lane.b32.xlu0 %v692, 64
    %v696 = vpop.permute.xlu0 %695
    %v698 = vmul.f32 %v691, %v696
    %700 = vrot.lane.b32.xlu0 %v698, 32
    %v701 = vpop.permute.xlu0 %700
    %v703 = vadd.f32 %v693, %v701
    %v704 = vtanh.pop %v703
    %706 = vrot.lane.b32.xlu0 %v704, 64
    %v707 = vpop.permute.xlu0 %706
    %v709 = vmul.f32 %v691, %v707
    %s710 = scalar_lea.vmem [#allocation2], 40
    %v711 = vld [vmem:[%s710] sm:$0xff]
    %713 = vrot.lane.b32.xlu0 %v709, 32
    %v714 = vpop.permute.xlu0 %713
    %v715 = vsel %vm203, %v714, 0
    %717 = vmatprep.subr.mxu0 0.0
    %718 = vmatpush1.msra.mxu0 %v198
    %719 = vmatprep.subr.mxu0 0.0
    %720 = vmatpush1.msra.mxu0 %v199
    %721 = vmatprep.subr.mxu0 0.0
    %722 = vmatpush1.msra.mxu0 %v200
    %723 = vmatprep.subr.mxu0 0.0
    %724 = vmatpush1.msra.mxu0 %v201
    %725 = vmatprep.subr.mxu0 0.0
    %726 = vmatpush1.msra.mxu0 0.0
    %727 = vmatprep.subr.mxu0 0.0
    %728 = vmatpush1.msra.mxu0 0.0
    %729 = vmatprep.subr.mxu0 0.0
    %730 = vmatpush1.msra.mxu0 0.0
    %731 = vmatprep.subr.mxu0 0.0
    %732 = vmatpush1.msra.mxu0 0.0
    %733 = vmatprep.subr.mxu0 0.0
    %734 = vmatpush1.msra.mxu0 0.0
    %735 = vmatprep.subr.mxu0 0.0
    %736 = vmatpush1.msra.mxu0 0.0
    %737 = vmatprep.subr.mxu0 0.0
    %738 = vmatpush1.msra.mxu0 0.0
    %739 = vmatprep.subr.mxu0 0.0
    %740 = vmatpush1.msra.mxu0 0.0
    %741 = vmatprep.subr.mxu0 0.0
    %742 = vmatpush1.msra.mxu0 0.0
    %743 = vmatprep.subr.mxu0 0.0
    %744 = vmatpush1.msra.mxu0 0.0
    %745 = vmatprep.subr.mxu0 0.0
    %746 = vmatpush1.msra.mxu0 0.0
    %747 = vmatprep.subr.mxu0 0.0
    %748 = vmatpush1.msra.mxu0 0.0
    %749 = vmatprep.subr.mxu0 0.0
    %750 = vmatpush1.msra.mxu0 0.0
    %751 = vmatprep.subr.mxu0 0.0
    %752 = vmatpush1.msra.mxu0 0.0
    %753 = vmatprep.subr.mxu0 0.0
    %754 = vmatpush1.msra.mxu0 0.0
    %755 = vmatprep.subr.mxu0 0.0
    %756 = vmatpush1.msra.mxu0 0.0
    %757 = vmatprep.subr.mxu0 0.0
    %758 = vmatpush1.msra.mxu0 0.0
    %759 = vmatprep.subr.mxu0 0.0
    %760 = vmatpush1.msra.mxu0 0.0
    %761 = vmatprep.subr.mxu0 0.0
    %762 = vmatpush1.msra.mxu0 0.0
    %763 = vmatprep.subr.mxu0 0.0
    %764 = vmatpush1.msra.mxu0 0.0
    %765 = vmatprep.subr.mxu0 0.0
    %766 = vmatpush1.msra.mxu0 0.0
    %767 = vmatprep.subr.mxu0 0.0
    %768 = vmatpush1.msra.mxu0 0.0
    %769 = vmatprep.subr.mxu0 0.0
    %770 = vmatpush1.msra.mxu0 0.0
    %771 = vmatprep.subr.mxu0 0.0
    %772 = vmatpush1.msra.mxu0 0.0
    %773 = vmatprep.subr.mxu0 0.0
    %774 = vmatpush1.msra.mxu0 0.0
    %775 = vmatprep.subr.mxu0 0.0
    %776 = vmatpush1.msra.mxu0 0.0
    %777 = vmatprep.subr.mxu0 0.0
    %778 = vmatpush1.msra.mxu0 0.0
    %779 = vmatprep.subr.mxu0 0.0
    %780 = vmatpush1.msra.mxu0 0.0
    %781 = vmatprep.mubr.f32.mxu0 0.0
    %782 = vmatmul.mubr.f32.gmra.mrb[0].mxu0 %v715
    %v783 = vpop.f32.mrb[0].mxu0
    %v784 = vadd.f32 0.0, %v783
    %v785 = vpop.f32.mrb[0].mxu0
    %786 = vdwg.mxu0
    %v787 = vadd.f32 %v711, %v784
    %v788 = vxor.u32 %v787, 2147483648
    %v789 = vmul.f32 %v788, 1.442695
    %v790 = vpow.pop %v789
    %v791 = vadd.f32 %v790, 1.0
    %v792 = vrcp.pop %v791
    %v793 = vmul.f32 1.0, %v792
    %v794 = vtanh.pop %v787
    %v795 = vmul.f32 %v793, %v703
    %797 = vrot.lane.b32.xlu0 %v794, 64
    %v798 = vpop.permute.xlu0 %797
    %v800 = vmul.f32 %v793, %v798
    %802 = vrot.lane.b32.xlu0 %v800, 32
    %v803 = vpop.permute.xlu0 %802
    %v805 = vadd.f32 %v795, %v803
    %v806 = vtanh.pop %v805
    %808 = vrot.lane.b32.xlu0 %v806, 64
    %v809 = vpop.permute.xlu0 %808
    %v811 = vmul.f32 %v793, %v809
    %s812 = scalar_lea.vmem [#allocation2], 48
    %v813 = vld [vmem:[%s812] sm:$0xff]
    %815 = vrot.lane.b32.xlu0 %v811, 32
    %v816 = vpop.permute.xlu0 %815
    %v817 = vsel %vm203, %v816, 0
    %819 = vmatprep.subr.mxu0 0.0
    %820 = vmatpush1.msra.mxu0 %v198
    %821 = vmatprep.subr.mxu0 0.0
    %822 = vmatpush1.msra.mxu0 %v199
    %823 = vmatprep.subr.mxu0 0.0
    %824 = vmatpush1.msra.mxu0 %v200
    %825 = vmatprep.subr.mxu0 0.0
    %826 = vmatpush1.msra.mxu0 %v201
    %827 = vmatprep.subr.mxu0 0.0
    %828 = vmatpush1.msra.mxu0 0.0
    %829 = vmatprep.subr.mxu0 0.0
    %830 = vmatpush1.msra.mxu0 0.0
    %831 = vmatprep.subr.mxu0 0.0
    %832 = vmatpush1.msra.mxu0 0.0
    %833 = vmatprep.subr.mxu0 0.0
    %834 = vmatpush1.msra.mxu0 0.0
    %835 = vmatprep.subr.mxu0 0.0
    %836 = vmatpush1.msra.mxu0 0.0
    %837 = vmatprep.subr.mxu0 0.0
    %838 = vmatpush1.msra.mxu0 0.0
    %839 = vmatprep.subr.mxu0 0.0
    %840 = vmatpush1.msra.mxu0 0.0
    %841 = vmatprep.subr.mxu0 0.0
    %842 = vmatpush1.msra.mxu0 0.0
    %843 = vmatprep.subr.mxu0 0.0
    %844 = vmatpush1.msra.mxu0 0.0
    %845 = vmatprep.subr.mxu0 0.0
    %846 = vmatpush1.msra.mxu0 0.0
    %847 = vmatprep.subr.mxu0 0.0
    %848 = vmatpush1.msra.mxu0 0.0
    %849 = vmatprep.subr.mxu0 0.0
    %850 = vmatpush1.msra.mxu0 0.0
    %851 = vmatprep.subr.mxu0 0.0
    %852 = vmatpush1.msra.mxu0 0.0
    %853 = vmatprep.subr.mxu0 0.0
    %854 = vmatpush1.msra.mxu0 0.0
    %855 = vmatprep.subr.mxu0 0.0
    %856 = vmatpush1.msra.mxu0 0.0
    %857 = vmatprep.subr.mxu0 0.0
    %858 = vmatpush1.msra.mxu0 0.0
    %859 = vmatprep.subr.mxu0 0.0
    %860 = vmatpush1.msra.mxu0 0.0
    %861 = vmatprep.subr.mxu0 0.0
    %862 = vmatpush1.msra.mxu0 0.0
    %863 = vmatprep.subr.mxu0 0.0
    %864 = vmatpush1.msra.mxu0 0.0
    %865 = vmatprep.subr.mxu0 0.0
    %866 = vmatpush1.msra.mxu0 0.0
    %867 = vmatprep.subr.mxu0 0.0
    %868 = vmatpush1.msra.mxu0 0.0
    %869 = vmatprep.subr.mxu0 0.0
    %870 = vmatpush1.msra.mxu0 0.0
    %871 = vmatprep.subr.mxu0 0.0
    %872 = vmatpush1.msra.mxu0 0.0
    %873 = vmatprep.subr.mxu0 0.0
    %874 = vmatpush1.msra.mxu0 0.0
    %875 = vmatprep.subr.mxu0 0.0
    %876 = vmatpush1.msra.mxu0 0.0
    %877 = vmatprep.subr.mxu0 0.0
    %878 = vmatpush1.msra.mxu0 0.0
    %879 = vmatprep.subr.mxu0 0.0
    %880 = vmatpush1.msra.mxu0 0.0
    %881 = vmatprep.subr.mxu0 0.0
    %882 = vmatpush1.msra.mxu0 0.0
    %883 = vmatprep.mubr.f32.mxu0 0.0
    %884 = vmatmul.mubr.f32.gmra.mrb[0].mxu0 %v817
    %v885 = vpop.f32.mrb[0].mxu0
    %v886 = vadd.f32 0.0, %v885
    %v887 = vpop.f32.mrb[0].mxu0
    %888 = vdwg.mxu0
    %v889 = vadd.f32 %v813, %v886
    %v890 = vxor.u32 %v889, 2147483648
    %v891 = vmul.f32 %v890, 1.442695
    %v892 = vpow.pop %v891
    %v893 = vadd.f32 %v892, 1.0
    %v894 = vrcp.pop %v893
    %v895 = vmul.f32 1.0, %v894
    %v896 = vtanh.pop %v889
    %v897 = vmul.f32 %v895, %v805
    %899 = vrot.lane.b32.xlu0 %v896, 64
    %v900 = vpop.permute.xlu0 %899
    %v902 = vmul.f32 %v895, %v900
    %904 = vrot.lane.b32.xlu0 %v902, 32
    %v905 = vpop.permute.xlu0 %904
    %v907 = vadd.f32 %v897, %v905
    %v908 = vtanh.pop %v907
    %910 = vrot.lane.b32.xlu0 %v908, 64
    %v911 = vpop.permute.xlu0 %910
    %v913 = vmul.f32 %v895, %v911
    %s914 = scalar_lea.vmem [#allocation2], 56
    %v915 = vld [vmem:[%s914] sm:$0xff]
    %917 = vrot.lane.b32.xlu0 %v913, 32
    %v918 = vpop.permute.xlu0 %917
    %v919 = vsel %vm203, %v918, 0
    %921 = vmatprep.subr.mxu0 0.0
    %922 = vmatpush1.msra.mxu0 %v198
    %923 = vmatprep.subr.mxu0 0.0
    %924 = vmatpush1.msra.mxu0 %v199
    %925 = vmatprep.subr.mxu0 0.0
    %926 = vmatpush1.msra.mxu0 %v200
    %927 = vmatprep.subr.mxu0 0.0
    %928 = vmatpush1.msra.mxu0 %v201
    %929 = vmatprep.subr.mxu0 0.0
    %930 = vmatpush1.msra.mxu0 0.0
    %931 = vmatprep.subr.mxu0 0.0
    %932 = vmatpush1.msra.mxu0 0.0
    %933 = vmatprep.subr.mxu0 0.0
    %934 = vmatpush1.msra.mxu0 0.0
    %935 = vmatprep.subr.mxu0 0.0
    %936 = vmatpush1.msra.mxu0 0.0
    %937 = vmatprep.subr.mxu0 0.0
    %938 = vmatpush1.msra.mxu0 0.0
    %939 = vmatprep.subr.mxu0 0.0
    %940 = vmatpush1.msra.mxu0 0.0
    %941 = vmatprep.subr.mxu0 0.0
    %942 = vmatpush1.msra.mxu0 0.0
    %943 = vmatprep.subr.mxu0 0.0
    %944 = vmatpush1.msra.mxu0 0.0
    %945 = vmatprep.subr.mxu0 0.0
    %946 = vmatpush1.msra.mxu0 0.0
    %947 = vmatprep.subr.mxu0 0.0
    %948 = vmatpush1.msra.mxu0 0.0
    %949 = vmatprep.subr.mxu0 0.0
    %950 = vmatpush1.msra.mxu0 0.0
    %951 = vmatprep.subr.mxu0 0.0
    %952 = vmatpush1.msra.mxu0 0.0
    %953 = vmatprep.subr.mxu0 0.0
    %954 = vmatpush1.msra.mxu0 0.0
    %955 = vmatprep.subr.mxu0 0.0
    %956 = vmatpush1.msra.mxu0 0.0
    %957 = vmatprep.subr.mxu0 0.0
    %958 = vmatpush1.msra.mxu0 0.0
    %959 = vmatprep.subr.mxu0 0.0
    %960 = vmatpush1.msra.mxu0 0.0
    %961 = vmatprep.subr.mxu0 0.0
    %962 = vmatpush1.msra.mxu0 0.0
    %963 = vmatprep.subr.mxu0 0.0
    %964 = vmatpush1.msra.mxu0 0.0
    %965 = vmatprep.subr.mxu0 0.0
    %966 = vmatpush1.msra.mxu0 0.0
    %967 = vmatprep.subr.mxu0 0.0
    %968 = vmatpush1.msra.mxu0 0.0
    %969 = vmatprep.subr.mxu0 0.0
    %970 = vmatpush1.msra.mxu0 0.0
    %971 = vmatprep.subr.mxu0 0.0
    %972 = vmatpush1.msra.mxu0 0.0
    %973 = vmatprep.subr.mxu0 0.0
    %974 = vmatpush1.msra.mxu0 0.0
    %975 = vmatprep.subr.mxu0 0.0
    %976 = vmatpush1.msra.mxu0 0.0
    %977 = vmatprep.subr.mxu0 0.0
    %978 = vmatpush1.msra.mxu0 0.0
    %979 = vmatprep.subr.mxu0 0.0
    %980 = vmatpush1.msra.mxu0 0.0
    %981 = vmatprep.subr.mxu0 0.0
    %982 = vmatpush1.msra.mxu0 0.0
    %983 = vmatprep.subr.mxu0 0.0
    %984 = vmatpush1.msra.mxu0 0.0
    %985 = vmatprep.mubr.f32.mxu0 0.0
    %986 = vmatmul.mubr.f32.gmra.mrb[0].mxu0 %v919
    %v987 = vpop.f32.mrb[0].mxu0
    %v988 = vadd.f32 0.0, %v987
    %v989 = vpop.f32.mrb[0].mxu0
    %990 = vdwg.mxu0
    %v991 = vadd.f32 %v915, %v988
    %v992 = vxor.u32 %v991, 2147483648
    %v993 = vmul.f32 %v992, 1.442695
    %v994 = vpow.pop %v993
    %v995 = vadd.f32 %v994, 1.0
    %v996 = vrcp.pop %v995
    %v997 = vmul.f32 1.0, %v996
    %v998 = vtanh.pop %v991
    %v999 = vmul.f32 %v997, %v907
    %1001 = vrot.lane.b32.xlu0 %v998, 64
    %v1002 = vpop.permute.xlu0 %1001
    %v1004 = vmul.f32 %v997, %v1002
    %1006 = vrot.lane.b32.xlu0 %v1004, 32
    %v1007 = vpop.permute.xlu0 %1006
    %v1009 = vadd.f32 %v999, %v1007
    %v1010 = vtanh.pop %v1009
    %1012 = vrot.lane.b32.xlu0 %v1010, 64
    %v1013 = vpop.permute.xlu0 %1012
    %v1015 = vmul.f32 %v997, %v1013
    %s1016 = scalar_lea.vmem [#allocation2], 64
    %v1017 = vld [vmem:[%s1016] sm:$0xff]
    %1019 = vrot.lane.b32.xlu0 %v1015, 32
    %v1020 = vpop.permute.xlu0 %1019
    %v1021 = vsel %vm203, %v1020, 0
    %1023 = vmatprep.subr.mxu0 0.0
    %1024 = vmatpush1.msra.mxu0 %v198
    %1025 = vmatprep.subr.mxu0 0.0
    %1026 = vmatpush1.msra.mxu0 %v199
    %1027 = vmatprep.subr.mxu0 0.0
    %1028 = vmatpush1.msra.mxu0 %v200
    %1029 = vmatprep.subr.mxu0 0.0
    %1030 = vmatpush1.msra.mxu0 %v201
    %1031 = vmatprep.subr.mxu0 0.0
    %1032 = vmatpush1.msra.mxu0 0.0
    %1033 = vmatprep.subr.mxu0 0.0
    %1034 = vmatpush1.msra.mxu0 0.0
    %1035 = vmatprep.subr.mxu0 0.0
    %1036 = vmatpush1.msra.mxu0 0.0
    %1037 = vmatprep.subr.mxu0 0.0
    %1038 = vmatpush1.msra.mxu0 0.0
    %1039 = vmatprep.subr.mxu0 0.0
    %1040 = vmatpush1.msra.mxu0 0.0
    %1041 = vmatprep.subr.mxu0 0.0
    %1042 = vmatpush1.msra.mxu0 0.0
    %1043 = vmatprep.subr.mxu0 0.0
    %1044 = vmatpush1.msra.mxu0 0.0
    %1045 = vmatprep.subr.mxu0 0.0
    %1046 = vmatpush1.msra.mxu0 0.0
    %1047 = vmatprep.subr.mxu0 0.0
    %1048 = vmatpush1.msra.mxu0 0.0
    %1049 = vmatprep.subr.mxu0 0.0
    %1050 = vmatpush1.msra.mxu0 0.0
    %1051 = vmatprep.subr.mxu0 0.0
    %1052 = vmatpush1.msra.mxu0 0.0
    %1053 = vmatprep.subr.mxu0 0.0
    %1054 = vmatpush1.msra.mxu0 0.0
    %1055 = vmatprep.subr.mxu0 0.0
    %1056 = vmatpush1.msra.mxu0 0.0
    %1057 = vmatprep.subr.mxu0 0.0
    %1058 = vmatpush1.msra.mxu0 0.0
    %1059 = vmatprep.subr.mxu0 0.0
    %1060 = vmatpush1.msra.mxu0 0.0
    %1061 = vmatprep.subr.mxu0 0.0
    %1062 = vmatpush1.msra.mxu0 0.0
    %1063 = vmatprep.subr.mxu0 0.0
    %1064 = vmatpush1.msra.mxu0 0.0
    %1065 = vmatprep.subr.mxu0 0.0
    %1066 = vmatpush1.msra.mxu0 0.0
    %1067 = vmatprep.subr.mxu0 0.0
    %1068 = vmatpush1.msra.mxu0 0.0
    %1069 = vmatprep.subr.mxu0 0.0
    %1070 = vmatpush1.msra.mxu0 0.0
    %1071 = vmatprep.subr.mxu0 0.0
    %1072 = vmatpush1.msra.mxu0 0.0
    %1073 = vmatprep.subr.mxu0 0.0
    %1074 = vmatpush1.msra.mxu0 0.0
    %1075 = vmatprep.subr.mxu0 0.0
    %1076 = vmatpush1.msra.mxu0 0.0
    %1077 = vmatprep.subr.mxu0 0.0
    %1078 = vmatpush1.msra.mxu0 0.0
    %1079 = vmatprep.subr.mxu0 0.0
    %1080 = vmatpush1.msra.mxu0 0.0
    %1081 = vmatprep.subr.mxu0 0.0
    %1082 = vmatpush1.msra.mxu0 0.0
    %1083 = vmatprep.subr.mxu0 0.0
    %1084 = vmatpush1.msra.mxu0 0.0
    %1085 = vmatprep.subr.mxu0 0.0
    %1086 = vmatpush1.msra.mxu0 0.0
    %1087 = vmatprep.mubr.f32.mxu0 0.0
    %1088 = vmatmul.mubr.f32.gmra.mrb[0].mxu0 %v1021
    %v1089 = vpop.f32.mrb[0].mxu0
    %v1090 = vadd.f32 0.0, %v1089
    %v1091 = vpop.f32.mrb[0].mxu0
    %1092 = vdwg.mxu0
    %v1093 = vadd.f32 %v1017, %v1090
    %v1094 = vxor.u32 %v1093, 2147483648
    %v1095 = vmul.f32 %v1094, 1.442695
    %v1096 = vpow.pop %v1095
    %v1097 = vadd.f32 %v1096, 1.0
    %v1098 = vrcp.pop %v1097
    %v1099 = vmul.f32 1.0, %v1098
    %v1100 = vtanh.pop %v1093
    %v1101 = vmul.f32 %v1099, %v1009
    %1103 = vrot.lane.b32.xlu0 %v1100, 64
    %v1104 = vpop.permute.xlu0 %1103
    %v1106 = vmul.f32 %v1099, %v1104
    %1108 = vrot.lane.b32.xlu0 %v1106, 32
    %v1109 = vpop.permute.xlu0 %1108
    %v1111 = vadd.f32 %v1101, %v1109
    %v1112 = vtanh.pop %v1111
    %1114 = vrot.lane.b32.xlu0 %v1112, 64
    %v1115 = vpop.permute.xlu0 %1114
    %v1117 = vmul.f32 %v1099, %v1115
    %s1118 = scalar_lea.vmem [#allocation2], 72
    %v1119 = vld [vmem:[%s1118] sm:$0xff]
    %1121 = vrot.lane.b32.xlu0 %v1117, 32
    %v1122 = vpop.permute.xlu0 %1121
    %v1123 = vsel %vm203, %v1122, 0
    %1125 = vmatprep.subr.mxu0 0.0
    %1126 = vmatpush1.msra.mxu0 %v198
    %1127 = vmatprep.subr.mxu0 0.0
    %1128 = vmatpush1.msra.mxu0 %v199
    %1129 = vmatprep.subr.mxu0 0.0
    %1130 = vmatpush1.msra.mxu0 %v200
    %1131 = vmatprep.subr.mxu0 0.0
    %1132 = vmatpush1.msra.mxu0 %v201
    %1133 = vmatprep.subr.mxu0 0.0
    %1134 = vmatpush1.msra.mxu0 0.0
    %1135 = vmatprep.subr.mxu0 0.0
    %1136 = vmatpush1.msra.mxu0 0.0
    %1137 = vmatprep.subr.mxu0 0.0
    %1138 = vmatpush1.msra.mxu0 0.0
    %1139 = vmatprep.subr.mxu0 0.0
    %1140 = vmatpush1.msra.mxu0 0.0
    %1141 = vmatprep.subr.mxu0 0.0
    %1142 = vmatpush1.msra.mxu0 0.0
    %1143 = vmatprep.subr.mxu0 0.0
    %1144 = vmatpush1.msra.mxu0 0.0
    %1145 = vmatprep.subr.mxu0 0.0
    %1146 = vmatpush1.msra.mxu0 0.0
    %1147 = vmatprep.subr.mxu0 0.0
    %1148 = vmatpush1.msra.mxu0 0.0
    %1149 = vmatprep.subr.mxu0 0.0
    %1150 = vmatpush1.msra.mxu0 0.0
    %1151 = vmatprep.subr.mxu0 0.0
    %1152 = vmatpush1.msra.mxu0 0.0
    %1153 = vmatprep.subr.mxu0 0.0
    %1154 = vmatpush1.msra.mxu0 0.0
    %1155 = vmatprep.subr.mxu0 0.0
    %1156 = vmatpush1.msra.mxu0 0.0
    %1157 = vmatprep.subr.mxu0 0.0
    %1158 = vmatpush1.msra.mxu0 0.0
    %1159 = vmatprep.subr.mxu0 0.0
    %1160 = vmatpush1.msra.mxu0 0.0
    %1161 = vmatprep.subr.mxu0 0.0
    %1162 = vmatpush1.msra.mxu0 0.0
    %1163 = vmatprep.subr.mxu0 0.0
    %1164 = vmatpush1.msra.mxu0 0.0
    %1165 = vmatprep.subr.mxu0 0.0
    %1166 = vmatpush1.msra.mxu0 0.0
    %1167 = vmatprep.subr.mxu0 0.0
    %1168 = vmatpush1.msra.mxu0 0.0
    %1169 = vmatprep.subr.mxu0 0.0
    %1170 = vmatpush1.msra.mxu0 0.0
    %1171 = vmatprep.subr.mxu0 0.0
    %1172 = vmatpush1.msra.mxu0 0.0
    %1173 = vmatprep.subr.mxu0 0.0
    %1174 = vmatpush1.msra.mxu0 0.0
    %1175 = vmatprep.subr.mxu0 0.0
    %1176 = vmatpush1.msra.mxu0 0.0
    %1177 = vmatprep.subr.mxu0 0.0
    %1178 = vmatpush1.msra.mxu0 0.0
    %1179 = vmatprep.subr.mxu0 0.0
    %1180 = vmatpush1.msra.mxu0 0.0
    %1181 = vmatprep.subr.mxu0 0.0
    %1182 = vmatpush1.msra.mxu0 0.0
    %1183 = vmatprep.subr.mxu0 0.0
    %1184 = vmatpush1.msra.mxu0 0.0
    %1185 = vmatprep.subr.mxu0 0.0
    %1186 = vmatpush1.msra.mxu0 0.0
    %1187 = vmatprep.subr.mxu0 0.0
    %1188 = vmatpush1.msra.mxu0 0.0
    %1189 = vmatprep.mubr.f32.mxu0 0.0
    %1190 = vmatmul.mubr.f32.gmra.mrb[0].mxu0 %v1123
    %v1191 = vpop.f32.mrb[0].mxu0
    %v1192 = vadd.f32 0.0, %v1191
    %v1193 = vpop.f32.mrb[0].mxu0
    %1194 = vdwg.mxu0
    %v1195 = vadd.f32 %v1119, %v1192
    %v1196 = vxor.u32 %v1195, 2147483648
    %v1197 = vmul.f32 %v1196, 1.442695
    %v1198 = vpow.pop %v1197
    %v1199 = vadd.f32 %v1198, 1.0
    %v1200 = vrcp.pop %v1199
    %v1201 = vmul.f32 1.0, %v1200
    %v1202 = vtanh.pop %v1195
    %v1203 = vmul.f32 %v1201, %v1111
    %1205 = vrot.lane.b32.xlu0 %v1202, 64
    %v1206 = vpop.permute.xlu0 %1205
    %v1208 = vmul.f32 %v1201, %v1206
    %1210 = vrot.lane.b32.xlu0 %v1208, 32
    %v1211 = vpop.permute.xlu0 %1210
    %v1213 = vadd.f32 %v1203, %v1211
    %v1214 = vtanh.pop %v1213
    %1216 = vrot.lane.b32.xlu0 %v1214, 64
    %v1217 = vpop.permute.xlu0 %1216
    %v1219 = vmul.f32 %v1201, %v1217
    %v1220 = vld [vmem:[%s4] sm:$0xff]
    %v1221 = vld [vmem:[%s4 + $0x8] sm:$0xff]
    %v1222 = vld [vmem:[%s4 + $0x10] sm:$0xff]
    %v1223 = vld [vmem:[%s4 + $0x18] sm:$0xff]
    %v1224 = vmul.f32 %v1220, %v1220
    %v1225 = vmul.f32 %v1221, %v1221
    %v1226 = vmul.f32 %v1222, %v1222
    %v1227 = vmul.f32 %v1223, %v1223
    %v1228 = vsel %vm42, %v1224, 0.0
    %1229 = vadd.xlane.f32.xlu0 %v1228
    %v1230 = vpop.xlane.xlu0 %1229
    %v1231 = vsel %vm42, %v1225, 0.0
    %1232 = vadd.xlane.f32.xlu0 %v1231
    %v1233 = vpop.xlane.xlu0 %1232
    %v1234 = vsel %vm42, %v1226, 0.0
    %1235 = vadd.xlane.f32.xlu0 %v1234
    %v1236 = vpop.xlane.xlu0 %1235
    %v1237 = vsel %vm42, %v1227, 0.0
    %1238 = vadd.xlane.f32.xlu0 %v1237
    %v1239 = vpop.xlane.xlu0 %1238
    %v1240 = vrsqrt.pop %v1230
    %v1241 = vmul.f32 %v1230, %v1240
    %vm1242 = vcmp.eq.f32.partialorder %v1230, inf
    %v1243 = vsel %vm1242, %v1230, %v1241
    %vm1244 = vcmp.eq.f32.partialorder %v1230, 0.0
    %v1245 = vand.u32 %v1230, 2147483648
    %v1246 = vsel %vm1244, %v1245, %v1243
    %v1247 = vrsqrt.pop %v1233
    %v1248 = vmul.f32 %v1233, %v1247
    %vm1249 = vcmp.eq.f32.partialorder %v1233, inf
    %v1250 = vsel %vm1249, %v1233, %v1248
    %vm1251 = vcmp.eq.f32.partialorder %v1233, 0.0
    %v1252 = vand.u32 %v1233, 2147483648
    %v1253 = vsel %vm1251, %v1252, %v1250
    %v1254 = vrsqrt.pop %v1236
    %v1255 = vmul.f32 %v1236, %v1254
    %vm1256 = vcmp.eq.f32.partialorder %v1236, inf
    %v1257 = vsel %vm1256, %v1236, %v1255
    %vm1258 = vcmp.eq.f32.partialorder %v1236, 0.0
    %v1259 = vand.u32 %v1236, 2147483648
    %v1260 = vsel %vm1258, %v1259, %v1257
    %v1261 = vrsqrt.pop %v1239
    %v1262 = vmul.f32 %v1239, %v1261
    %vm1263 = vcmp.eq.f32.partialorder %v1239, inf
    %v1264 = vsel %vm1263, %v1239, %v1262
    %vm1265 = vcmp.eq.f32.partialorder %v1239, 0.0
    %v1266 = vand.u32 %v1239, 2147483648
    %v1267 = vsel %vm1265, %v1266, %v1264
    %v1268 = vmax.f32 %v1246, 1.0
    %v1269 = vmax.f32 %v1253, 1.0
    %v1270 = vmax.f32 %v1260, 1.0
    %v1271 = vmax.f32 %v1267, 1.0
    %v1272 = vmin.f32 %v1268, 2.0
    %v1273 = vmin.f32 %v1269, 2.0
    %v1274 = vmin.f32 %v1270, 2.0
    %v1275 = vmin.f32 %v1271, 2.0
    %v1276 = vrcp.pop %v1268
    %v1277 = vrcp.pop %v1269
    %v1278 = vrcp.pop %v1270
    %v1279 = vrcp.pop %v1271
    %v1280 = vmul.f32 %v1272, %v1276
    %v1281 = vmul.f32 %v1273, %v1277
    %v1282 = vmul.f32 %v1274, %v1278
    %v1283 = vmul.f32 %v1275, %v1279
    %v1284 = vmul.f32 %v1220, %v1280
    %v1285 = vmul.f32 %v1221, %v1281
    %v1286 = vmul.f32 %v1222, %v1282
    %v1287 = vmul.f32 %v1223, %v1283
    %v1288 = vld [vmem:[%s5] sm:$0x1]
    %v1290 = vlaneseq
    %v1291 = vshrl.u32 %v1290, 7
    %v1292 = vsub.s32 0, %v1291
    %v1293 = vrot.slane %v1288, %v1292
    %1296 = vrot.lane.b32.xlu0 %v1219, 32
    %v1297 = vpop.permute.xlu0 %1296
    %v1298 = vsel %vm203, %v1297, 0
    %1300 = vmatprep.subr.mxu0 0.0
    %1301 = vmatpush1.msra.mxu0 %v1284
    %1302 = vmatprep.subr.mxu0 0.0
    %1303 = vmatpush1.msra.mxu0 %v1285
    %1304 = vmatprep.subr.mxu0 0.0
    %1305 = vmatpush1.msra.mxu0 %v1286
    %1306 = vmatprep.subr.mxu0 0.0
    %1307 = vmatpush1.msra.mxu0 %v1287
    %1308 = vmatprep.subr.mxu0 0.0
    %1309 = vmatpush1.msra.mxu0 0.0
    %1310 = vmatprep.subr.mxu0 0.0
    %1311 = vmatpush1.msra.mxu0 0.0
    %1312 = vmatprep.subr.mxu0 0.0
    %1313 = vmatpush1.msra.mxu0 0.0
    %1314 = vmatprep.subr.mxu0 0.0
    %1315 = vmatpush1.msra.mxu0 0.0
    %1316 = vmatprep.subr.mxu0 0.0
    %1317 = vmatpush1.msra.mxu0 0.0
    %1318 = vmatprep.subr.mxu0 0.0
    %1319 = vmatpush1.msra.mxu0 0.0
    %1320 = vmatprep.subr.mxu0 0.0
    %1321 = vmatpush1.msra.mxu0 0.0
    %1322 = vmatprep.subr.mxu0 0.0
    %1323 = vmatpush1.msra.mxu0 0.0
    %1324 = vmatprep.subr.mxu0 0.0
    %1325 = vmatpush1.msra.mxu0 0.0
    %1326 = vmatprep.subr.mxu0 0.0
    %1327 = vmatpush1.msra.mxu0 0.0
    %1328 = vmatprep.subr.mxu0 0.0
    %1329 = vmatpush1.msra.mxu0 0.0
    %1330 = vmatprep.subr.mxu0 0.0
    %1331 = vmatpush1.msra.mxu0 0.0
    %1332 = vmatprep.subr.mxu0 0.0
    %1333 = vmatpush1.msra.mxu0 0.0
    %1334 = vmatprep.subr.mxu0 0.0
    %1335 = vmatpush1.msra.mxu0 0.0
    %1336 = vmatprep.subr.mxu0 0.0
    %1337 = vmatpush1.msra.mxu0 0.0
    %1338 = vmatprep.subr.mxu0 0.0
    %1339 = vmatpush1.msra.mxu0 0.0
    %1340 = vmatprep.subr.mxu0 0.0
    %1341 = vmatpush1.msra.mxu0 0.0
    %1342 = vmatprep.subr.mxu0 0.0
    %1343 = vmatpush1.msra.mxu0 0.0
    %1344 = vmatprep.subr.mxu0 0.0
    %1345 = vmatpush1.msra.mxu0 0.0
    %1346 = vmatprep.subr.mxu0 0.0
    %1347 = vmatpush1.msra.mxu0 0.0
    %1348 = vmatprep.subr.mxu0 0.0
    %1349 = vmatpush1.msra.mxu0 0.0
    %1350 = vmatprep.subr.mxu0 0.0
    %1351 = vmatpush1.msra.mxu0 0.0
    %1352 = vmatprep.subr.mxu0 0.0
    %1353 = vmatpush1.msra.mxu0 0.0
    %1354 = vmatprep.subr.mxu0 0.0
    %1355 = vmatpush1.msra.mxu0 0.0
    %1356 = vmatprep.subr.mxu0 0.0
    %1357 = vmatpush1.msra.mxu0 0.0
    %1358 = vmatprep.subr.mxu0 0.0
    %1359 = vmatpush1.msra.mxu0 0.0
    %1360 = vmatprep.subr.mxu0 0.0
    %1361 = vmatpush1.msra.mxu0 0.0
    %1362 = vmatprep.subr.mxu0 0.0
    %1363 = vmatpush1.msra.mxu0 0.0
    %1364 = vmatprep.mubr.f32.mxu0 0.0
    %1365 = vmatmul.mubr.f32.gmra.mrb[0].mxu0 %v1298
    %v1366 = vpop.f32.mrb[0].mxu0
    %v1367 = vadd.f32 %v1293, %v1366
    %v1368 = vpop.f32.mrb[0].mxu0
    %1369 = vdwg.mxu0
    %v1370 = vsel %vm42, %v1367, -inf
    %1371 = vmax.xlane.f32.xlu0 %v1370
    %v1372 = vpop.xlane.xlu0 %1371
    %v1373 = vsub.f32 %v1367, %v1372
    %v1374 = vmul.f32 %v1373, 1.442695
    %v1375 = vpow.pop %v1374
    %v1376 = vsel %vm42, %v1375, 0.0
    %1377 = vadd.xlane.f32.xlu0 %v1376
    %v1378 = vpop.xlane.xlu0 %1377
    %v1379 = vrcp.pop %v1378
    %v1380 = vmul.f32 %v1375, %v1379
    %1381 = vst.msk [vmem:[#allocation3] sm:$0xff] %vm42, %v1380
    // Predicated region
    $region26: #{tpu_custom_call.1} parent=1 // pred_check
      _
    $region27: #{tpu_custom_call.1} parent=1 // pred_check_branch
      %1383 = sbr.rel (0) target = $region29
    $region28: #{tpu_custom_call.1} parent=1 // pred_region
      %s1385 = ssub.s32 128, 128
      %1386 = vsyncadd [#allocation4], %s1385
      %s1388 = sshll.u32 [#allocation3], 4
      %s1389 = int_to_ptr.vmem [resolvable:$true] %s1388
      %1391 = dma.vmem_to_hbm [thread:$0]  %s1389, 128, %s6, [#allocation4]
    $region29: #{tpu_custom_call.1} parent=1 // pred_fallthru
      _
    // Predicated region
    $region30: #{tpu_custom_call.1} parent=1 // pred_check
      _
    $region31: #{tpu_custom_call.1} parent=1 // pred_check_branch
      %1393 = sbr.rel (0) target = $region33
    $region32: #{tpu_custom_call.1} parent=1 // pred_region
      %1394 = dma.done [#allocation4], 128
    $region33: #{tpu_custom_call.1} parent=1 // pred_fallthru
      _
    %1395 = vsyncpa [#allocation4], 1

</llo_original>
